<compile_context>
chip_gen: v7x
topology: tpu7x:2x2x1
jax: 0.10.0
libtpu: 0.0.40
codegen_flags: <defaults>
</compile_context>

<pallas_src>
import math

import jax
import jax.numpy as jnp
from jax.experimental import pallas as pl
from jax.experimental.pallas import tpu as pltpu

LN_EPS = 1e-5  # matches torch.nn.LayerNorm default


def _layer_norm(x, gamma, beta):
    # x: (S, D) f32, gamma/beta: (1, D) f32. Biased variance == nn.LayerNorm.
    mu = jnp.mean(x, axis=-1, keepdims=True)
    d = x - mu
    var = jnp.mean(d * d, axis=-1, keepdims=True)
    return d * jax.lax.rsqrt(var + LN_EPS) * gamma + beta


def _make_encoder_kernel(n_heads: int, d_model: int):
    d_k = d_model // n_heads
    inv_scale = 1.0 / math.sqrt(float(d_k))

    def kernel(x_ref,
               wq_ref, wk_ref, wv_ref, wo_ref,
               w1_ref, b1_ref, w2_ref, b2_ref,
               g1_ref, be1_ref, g2_ref, be2_ref,
               o_ref,
               qh_scr, kh_scr, vh_scr, ctx_scr, h_scr):
        l = pl.program_id(1)  # encoder-block index (sequential / "arbitrary")

        # Block 0 consumes the embedded input; later blocks consume the
        # carried activation held in VMEM scratch (no HBM round-trip).
        @pl.when(l == 0)
        def _():
            h_scr[...] = x_ref[0]

        x = h_scr[...]                              # (S, D) f32
        x_bf = x.astype(jnp.bfloat16)

        # ---- QKV projections: full-width bf16 MXU matmuls, f32 accumulate ----
        q = jnp.dot(x_bf, wq_ref[0], preferred_element_type=jnp.float32)
        k = jnp.dot(x_bf, wk_ref[0], preferred_element_type=jnp.float32)
        v = jnp.dot(x_bf, wv_ref[0], preferred_element_type=jnp.float32)

        # ---- split heads into (H, S, d_k) scratch (static lane slices) ----
        for h in range(n_heads):
            lo = h * d_k
            qh_scr[h] = q[:, lo:lo + d_k].astype(jnp.bfloat16)
            kh_scr[h] = k[:, lo:lo + d_k].astype(jnp.bfloat16)
            vh_scr[h] = v[:, lo:lo + d_k].astype(jnp.bfloat16)

        # ---- batched-head attention (no materialized transpose, no concat) ----
        s = jnp.einsum("hqd,hkd->hqk", qh_scr[...], kh_scr[...],
                       preferred_element_type=jnp.float32) * inv_scale
        # TODO(synk): the reference Encoder never forwards `mask` into the
        # blocks (dead code), so attention is unmasked here.
        s = s - jnp.max(s, axis=-1, keepdims=True)
        e = jnp.exp(s)                                           # f32 on EUP
        p = e * pl.reciprocal(jnp.sum(e, axis=-1, keepdims=True), approx=True)
        ctx3 = jnp.einsum("hqk,hkd->hqd", p.astype(jnp.bfloat16), vh_scr[...],
                          preferred_element_type=jnp.float32)    # (H, S, d_k)

        # ---- merge heads back to a lane-dense (S, D) tile ----
        for h in range(n_heads):
            lo = h * d_k
            ctx_scr[:, lo:lo + d_k] = ctx3[h].astype(jnp.bfloat16)

        attn = jnp.dot(ctx_scr[...], wo_ref[0],
                       preferred_element_type=jnp.float32)       # (S, D) f32

        # ---- AddNorm 1 (f32) ----
        h1 = _layer_norm(x + attn, g1_ref[0], be1_ref[0])

        # ---- FFN: Linear -> ReLU -> Linear (bf16 MXU, f32 accumulate) ----
        f = jnp.dot(h1.astype(jnp.bfloat16), w1_ref[0],
                    preferred_element_type=jnp.float32) + b1_ref[0]
        f = jnp.maximum(f, 0.0)
        f = jnp.dot(f.astype(jnp.bfloat16), w2_ref[0],
                    preferred_element_type=jnp.float32) + b2_ref[0]

        # ---- AddNorm 2 (f32): update carry + resident output tile ----
        out = _layer_norm(h1 + f, g2_ref[0], be2_ref[0])
        h_scr[...] = out
        o_ref[0] = out

    return kernel


def encoder_blocks_pallas(x, blocks, n_heads):
    """x: (B, S, D) f32 -> (B, S, D) f32; runs ALL encoder blocks fused."""
    B, S, D = x.shape
    L = len(blocks)
    F = blocks[0]["w1"].shape[1]
    H = n_heads
    d_k = D // H

    # Stack per-block params with a leading block axis; matmul weights as bf16
    # (halves DMA bytes + resident VMEM), vector params stay f32.
    bf = lambda name: jnp.stack([b[name] for b in blocks]).astype(jnp.bfloat16)
    f32 = lambda name: jnp.stack([b[name] for b in blocks]).astype(jnp.float32)
    wq, wk, wv, wo = bf("wq"), bf("wk"), bf("wv"), bf("wo")
    w1, w2 = bf("w1"), bf("w2")
    b1, b2 = f32("b1"), f32("b2")
    g1, be1, g2, be2 = f32("gamma1"), f32("beta1"), f32("gamma2"), f32("beta2")

    kernel = _make_encoder_kernel(n_heads, D)

    x_map = lambda b, l: (b, 0, 0)   # activation: per-batch tile, constant in l
    w_map = lambda b, l: (l, 0, 0)   # params: per-block tile -> auto prefetch

    in_specs = [
        pl.BlockSpec((1, S, D), x_map),    # x (embedded input)
        pl.BlockSpec((1, D, D), w_map),    # wq
        pl.BlockSpec((1, D, D), w_map),    # wk
        pl.BlockSpec((1, D, D), w_map),    # wv
        pl.BlockSpec((1, D, D), w_map),    # wo
        pl.BlockSpec((1, D, F), w_map),    # w1
        pl.BlockSpec((1, 1, F), w_map),    # b1
        pl.BlockSpec((1, F, D), w_map),    # w2
        pl.BlockSpec((1, 1, D), w_map),    # b2
        pl.BlockSpec((1, 1, D), w_map),    # gamma1
        pl.BlockSpec((1, 1, D), w_map),    # beta1
        pl.BlockSpec((1, 1, D), w_map),    # gamma2
        pl.BlockSpec((1, 1, D), w_map),    # beta2
    ]
    out_specs = pl.BlockSpec((1, S, D), x_map)

    scratch_shapes = [
        pltpu.VMEM((H, S, d_k), jnp.bfloat16),  # q heads
        pltpu.VMEM((H, S, d_k), jnp.bfloat16),  # k heads
        pltpu.VMEM((H, S, d_k), jnp.bfloat16),  # v heads
        pltpu.VMEM((S, D), jnp.bfloat16),       # merged attention context
        pltpu.VMEM((S, D), jnp.float32),        # activation carry across blocks
    ]

    # Advisory cost estimate (per-call totals) for the XLA scheduler.
    flops = B * L * (8 * S * D * D + 4 * S * S * D + 4 * S * D * F)
    transcendentals = B * L * H * S * S
    w_bytes = (4 * D * D + 2 * D * F) * 2 + (2 * F + 6 * D) * 4
    bytes_accessed = L * w_bytes + 2 * B * S * D * 4

    # Explicit VMEM budget (double-buffered bf16 weights + activation tiles +
    # scratch + in-kernel temporaries), clamped to v7x's 64 MiB physical VMEM.
    vmem_est = (2 * w_bytes
                + 4 * S * D * 4
                + 3 * H * S * d_k * 2 + S * D * 2 + S * D * 4
                + H * S * S * 4 + S * F * 4 + 6 * S * D * 4)
    vmem_limit = int(min(64 * 2**20, max(32 * 2**20, 2 * vmem_est)))

    return pl.pallas_call(
        kernel,
        out_shape=jax.ShapeDtypeStruct((B, S, D), jnp.float32),
        grid_spec=pltpu.PrefetchScalarGridSpec(
            num_scalar_prefetch=0,
            grid=(B, L),                 # block axis last (sequential carry)
            in_specs=in_specs,
            out_specs=out_specs,
            scratch_shapes=scratch_shapes,
        ),
        compiler_params=pltpu.CompilerParams(
            dimension_semantics=("parallel", "arbitrary"),
            vmem_limit_bytes=vmem_limit,
        ),
        cost_estimate=pl.CostEstimate(
            flops=flops,
            transcendentals=transcendentals,
            bytes_accessed=bytes_accessed,
        ),
    )(x, wq, wk, wv, wo, w1, b1, w2, b2, g1, be1, g2, be2)


# -------------- glue: embeddings / positional encoding / params --------------

def sinusoidal_pe(n_seq, d_model):
    pos = jnp.arange(n_seq, dtype=jnp.float32)[:, None]            # (S, 1)
    i = jnp.arange(0, d_model, 2, dtype=jnp.float32)[None, :]      # (1, D/2)
    div = jnp.exp(-i * (math.log(10000.0) / d_model))
    pe = jnp.zeros((n_seq, d_model), dtype=jnp.float32)
    pe = pe.at[:, 0::2].set(jnp.sin(pos * div))
    pe = pe.at[:, 1::2].set(jnp.cos(pos * div))
    return pe


def init_encoder_params(key, vocab_size, d_model, d_ff, n_blocks):
    keys = jax.random.split(key, 1 + n_blocks)
    params = {"embedding": jax.random.normal(keys[0], (vocab_size, d_model),
                                             jnp.float32) * 0.02}
    blocks = []
    for b in range(n_blocks):
        k = jax.random.split(keys[1 + b], 6)
        s_d = 1.0 / math.sqrt(d_model)
        s_f = 1.0 / math.sqrt(d_ff)
        blocks.append({
            "wq": jax.random.normal(k[0], (d_model, d_model), jnp.float32) * s_d,
            "wk": jax.random.normal(k[1], (d_model, d_model), jnp.float32) * s_d,
            "wv": jax.random.normal(k[2], (d_model, d_model), jnp.float32) * s_d,
            "wo": jax.random.normal(k[3], (d_model, d_model), jnp.float32) * s_d,
            "w1": jax.random.normal(k[4], (d_model, d_ff), jnp.float32) * s_d,
            "b1": jnp.zeros((1, d_ff), jnp.float32),
            "w2": jax.random.normal(k[5], (d_ff, d_model), jnp.float32) * s_f,
            "b2": jnp.zeros((1, d_model), jnp.float32),
            "gamma1": jnp.ones((1, d_model), jnp.float32),
            "beta1": jnp.zeros((1, d_model), jnp.float32),
            "gamma2": jnp.ones((1, d_model), jnp.float32),
            "beta2": jnp.zeros((1, d_model), jnp.float32),
        })
    params["blocks"] = blocks
    return params


def encoder_forward(tokens, params, *, d_model, n_heads, mask=None):
    # InputEmbeddings: lookup * sqrt(d_model)
    emb = jnp.take(params["embedding"], tokens, axis=0) * math.sqrt(d_model)
    # PositionalEncoding: add sinusoidal PE (dropout = identity in eval mode)
    pe = sinusoidal_pe(tokens.shape[1], d_model)
    x = (emb + pe[None, :, :]).astype(jnp.float32)
    # All encoder blocks fused into a single Pallas call (mask is dead code
    # in the reference Encoder and therefore ignored).
    return encoder_blocks_pallas(x, params["blocks"], n_heads)


if __name__ == "__main__":
    # Small but lane/sublane-aligned shapes (D multiple of 128, S multiple of 8).
    B, n_seq, vocab_size = 2, 16, 32
    d_model, n_heads, n_blocks = 128, 4, 2
    d_ff = 4 * d_model

    key = jax.random.PRNGKey(0)
    k_tok, k_par = jax.random.split(key)

    tokens = jax.random.randint(k_tok, (B, n_seq), 0, vocab_size, dtype=jnp.int32)
    params = init_encoder_params(k_par, vocab_size, d_model, d_ff, n_blocks)

    out = encoder_forward(tokens, params, d_model=d_model, n_heads=n_heads,
                          mask=None)
    out = jax.block_until_ready(out)
    assert out.shape == (B, n_seq, d_model) and out.dtype == jnp.float32
    assert bool(jnp.all(jnp.isfinite(out)))
    print("KERNEL_OK")
</pallas_src>

<mosaic_0001>
module attributes {stable_mosaic.version = 11 : i64} {
  func.func @kernel(%arg0: i32, %arg1: i32, %arg2: memref<1x16x128xf32, #tpu.memory_space<vmem>>, %arg3: memref<1x128x128xbf16, #tpu.memory_space<vmem>>, %arg4: memref<1x128x128xbf16, #tpu.memory_space<vmem>>, %arg5: memref<1x128x128xbf16, #tpu.memory_space<vmem>>, %arg6: memref<1x128x128xbf16, #tpu.memory_space<vmem>>, %arg7: memref<1x128x512xbf16, #tpu.memory_space<vmem>>, %arg8: memref<1x1x512xf32, #tpu.memory_space<vmem>>, %arg9: memref<1x512x128xbf16, #tpu.memory_space<vmem>>, %arg10: memref<1x1x128xf32, #tpu.memory_space<vmem>>, %arg11: memref<1x1x128xf32, #tpu.memory_space<vmem>>, %arg12: memref<1x1x128xf32, #tpu.memory_space<vmem>>, %arg13: memref<1x1x128xf32, #tpu.memory_space<vmem>>, %arg14: memref<1x1x128xf32, #tpu.memory_space<vmem>>, %arg15: memref<1x16x128xf32, #tpu.memory_space<vmem>>, %arg16: memref<4x16x32xbf16, #tpu.memory_space<vmem>>, %arg17: memref<4x16x32xbf16, #tpu.memory_space<vmem>>, %arg18: memref<4x16x32xbf16, #tpu.memory_space<vmem>>, %arg19: memref<16x128xbf16, #tpu.memory_space<vmem>>, %arg20: memref<16x128xf32, #tpu.memory_space<vmem>>) attributes {dimension_semantics = [#tpu.dimension_semantics<parallel>, #tpu.dimension_semantics<arbitrary>], iteration_bounds = array<i64: 2, 2>, scalar_prefetch = 0 : i64, scratch_operands = 5 : i64, tpu.core_type = #tpu.core_type<tc>, window_params = [{transform_indices = @transform_0, window_bounds = array<i64: 1, 16, 128>}, {transform_indices = @transform_1, window_bounds = array<i64: 1, 128, 128>}, {transform_indices = @transform_2, window_bounds = array<i64: 1, 128, 128>}, {transform_indices = @transform_3, window_bounds = array<i64: 1, 128, 128>}, {transform_indices = @transform_4, window_bounds = array<i64: 1, 128, 128>}, {transform_indices = @transform_5, window_bounds = array<i64: 1, 128, 512>}, {transform_indices = @transform_6, window_bounds = array<i64: 1, 1, 512>}, {transform_indices = @transform_7, window_bounds = array<i64: 1, 512, 128>}, {transform_indices = @transform_8, window_bounds = array<i64: 1, 1, 128>}, {transform_indices = @transform_9, window_bounds = array<i64: 1, 1, 128>}, {transform_indices = @transform_10, window_bounds = array<i64: 1, 1, 128>}, {transform_indices = @transform_11, window_bounds = array<i64: 1, 1, 128>}, {transform_indices = @transform_12, window_bounds = array<i64: 1, 1, 128>}, {transform_indices = @transform_13, window_bounds = array<i64: 1, 16, 128>}]} {
    %c0_i32 = arith.constant 0 : i32
    %0 = arith.cmpi eq, %arg1, %c0_i32 : i32
    %1 = arith.extui %0 : i1 to i32
    %c0_i32_0 = arith.constant 0 : i32
    %2 = arith.cmpi ne, %1, %c0_i32_0 : i32
    scf.if %2 {
      %c0_113 = arith.constant 0 : index
      %c0_114 = arith.constant 0 : index
      %c0_115 = arith.constant 0 : index
      %184 = vector.load %arg2[%c0_113, %c0_114, %c0_115] : memref<1x16x128xf32, #tpu.memory_space<vmem>>, vector<1x16x128xf32>
      %185 = vector.shape_cast %184 : vector<1x16x128xf32> to vector<16x128xf32>
      %c0_116 = arith.constant 0 : index
      %c0_117 = arith.constant 0 : index
      %186 = vector.load %arg20[%c0_116, %c0_117] : memref<16x128xf32, #tpu.memory_space<vmem>>, vector<16x128xf32>
      tpu.vector_store %arg20[%c0_116, %c0_117], %185 {strides = array<i32>} : memref<16x128xf32, #tpu.memory_space<vmem>>, vector<16x128xf32>,
    } else {
    }
    %c0 = arith.constant 0 : index
    %c0_1 = arith.constant 0 : index
    %3 = vector.load %arg20[%c0, %c0_1] : memref<16x128xf32, #tpu.memory_space<vmem>>, vector<16x128xf32>
    %4 = arith.truncf %3 : vector<16x128xf32> to vector<16x128xbf16>
    %c0_2 = arith.constant 0 : index
    %c0_3 = arith.constant 0 : index
    %c0_4 = arith.constant 0 : index
    %5 = vector.load %arg3[%c0_2, %c0_3, %c0_4] : memref<1x128x128xbf16, #tpu.memory_space<vmem>>, vector<1x128x128xbf16>
    %6 = vector.shape_cast %5 : vector<1x128x128xbf16> to vector<128x128xbf16>
    %cst = arith.constant dense<0.000000e+00> : vector<16x128xf32>
    %7 = tpu.matmul %4, %6, %cst {dimension_numbers = #tpu.dot_dimension_numbers<[1], [0], [0], [1], [0, 0, 1, 1], [], []>} : vector<16x128xbf16>, vector<128x128xbf16>, vector<16x128xf32> -> vector<16x128xf32>
    %c0_5 = arith.constant 0 : index
    %c0_6 = arith.constant 0 : index
    %c0_7 = arith.constant 0 : index
    %8 = vector.load %arg4[%c0_5, %c0_6, %c0_7] : memref<1x128x128xbf16, #tpu.memory_space<vmem>>, vector<1x128x128xbf16>
    %9 = vector.shape_cast %8 : vector<1x128x128xbf16> to vector<128x128xbf16>
    %cst_8 = arith.constant dense<0.000000e+00> : vector<16x128xf32>
    %10 = tpu.matmul %4, %9, %cst_8 {dimension_numbers = #tpu.dot_dimension_numbers<[1], [0], [0], [1], [0, 0, 1, 1], [], []>} : vector<16x128xbf16>, vector<128x128xbf16>, vector<16x128xf32> -> vector<16x128xf32>
    %c0_9 = arith.constant 0 : index
    %c0_10 = arith.constant 0 : index
    %c0_11 = arith.constant 0 : index
    %11 = vector.load %arg5[%c0_9, %c0_10, %c0_11] : memref<1x128x128xbf16, #tpu.memory_space<vmem>>, vector<1x128x128xbf16>
    %12 = vector.shape_cast %11 : vector<1x128x128xbf16> to vector<128x128xbf16>
    %cst_12 = arith.constant dense<0.000000e+00> : vector<16x128xf32>
    %13 = tpu.matmul %4, %12, %cst_12 {dimension_numbers = #tpu.dot_dimension_numbers<[1], [0], [0], [1], [0, 0, 1, 1], [], []>} : vector<16x128xbf16>, vector<128x128xbf16>, vector<16x128xf32> -> vector<16x128xf32>
    %14 = vector.extract_strided_slice %7 {offsets = [0, 0], sizes = [16, 32], strides = [1, 1]} : vector<16x128xf32> to vector<16x32xf32>
    %15 = arith.truncf %14 : vector<16x32xf32> to vector<16x32xbf16>
    %c0_13 = arith.constant 0 : index
    %c0_14 = arith.constant 0 : index
    %c0_15 = arith.constant 0 : index
    %16 = vector.load %arg16[%c0_13, %c0_14, %c0_15] : memref<4x16x32xbf16, #tpu.memory_space<vmem>>, vector<1x16x32xbf16>
    %17 = vector.shape_cast %16 : vector<1x16x32xbf16> to vector<16x32xbf16>
    %18 = vector.shape_cast %15 : vector<16x32xbf16> to vector<1x16x32xbf16>
    tpu.vector_store %arg16[%c0_13, %c0_14, %c0_15], %18 {strides = array<i32>} : memref<4x16x32xbf16, #tpu.memory_space<vmem>>, vector<1x16x32xbf16>,
    %19 = vector.extract_strided_slice %10 {offsets = [0, 0], sizes = [16, 32], strides = [1, 1]} : vector<16x128xf32> to vector<16x32xf32>
    %20 = arith.truncf %19 : vector<16x32xf32> to vector<16x32xbf16>
    %c0_16 = arith.constant 0 : index
    %c0_17 = arith.constant 0 : index
    %c0_18 = arith.constant 0 : index
    %21 = vector.load %arg17[%c0_16, %c0_17, %c0_18] : memref<4x16x32xbf16, #tpu.memory_space<vmem>>, vector<1x16x32xbf16>
    %22 = vector.shape_cast %21 : vector<1x16x32xbf16> to vector<16x32xbf16>
    %23 = vector.shape_cast %20 : vector<16x32xbf16> to vector<1x16x32xbf16>
    tpu.vector_store %arg17[%c0_16, %c0_17, %c0_18], %23 {strides = array<i32>} : memref<4x16x32xbf16, #tpu.memory_space<vmem>>, vector<1x16x32xbf16>,
    %24 = vector.extract_strided_slice %13 {offsets = [0, 0], sizes = [16, 32], strides = [1, 1]} : vector<16x128xf32> to vector<16x32xf32>
    %25 = arith.truncf %24 : vector<16x32xf32> to vector<16x32xbf16>
    %c0_19 = arith.constant 0 : index
    %c0_20 = arith.constant 0 : index
    %c0_21 = arith.constant 0 : index
    %26 = vector.load %arg18[%c0_19, %c0_20, %c0_21] : memref<4x16x32xbf16, #tpu.memory_space<vmem>>, vector<1x16x32xbf16>
    %27 = vector.shape_cast %26 : vector<1x16x32xbf16> to vector<16x32xbf16>
    %28 = vector.shape_cast %25 : vector<16x32xbf16> to vector<1x16x32xbf16>
    tpu.vector_store %arg18[%c0_19, %c0_20, %c0_21], %28 {strides = array<i32>} : memref<4x16x32xbf16, #tpu.memory_space<vmem>>, vector<1x16x32xbf16>,
    %29 = vector.extract_strided_slice %7 {offsets = [0, 32], sizes = [16, 32], strides = [1, 1]} : vector<16x128xf32> to vector<16x32xf32>
    %30 = arith.truncf %29 : vector<16x32xf32> to vector<16x32xbf16>
    %c1 = arith.constant 1 : index
    %c0_22 = arith.constant 0 : index
    %c0_23 = arith.constant 0 : index
    %31 = vector.load %arg16[%c1, %c0_22, %c0_23] : memref<4x16x32xbf16, #tpu.memory_space<vmem>>, vector<1x16x32xbf16>
    %32 = vector.shape_cast %31 : vector<1x16x32xbf16> to vector<16x32xbf16>
    %33 = vector.shape_cast %30 : vector<16x32xbf16> to vector<1x16x32xbf16>
    tpu.vector_store %arg16[%c1, %c0_22, %c0_23], %33 {strides = array<i32>} : memref<4x16x32xbf16, #tpu.memory_space<vmem>>, vector<1x16x32xbf16>,
    %34 = vector.extract_strided_slice %10 {offsets = [0, 32], sizes = [16, 32], strides = [1, 1]} : vector<16x128xf32> to vector<16x32xf32>
    %35 = arith.truncf %34 : vector<16x32xf32> to vector<16x32xbf16>
    %c1_24 = arith.constant 1 : index
    %c0_25 = arith.constant 0 : index
    %c0_26 = arith.constant 0 : index
    %36 = vector.load %arg17[%c1_24, %c0_25, %c0_26] : memref<4x16x32xbf16, #tpu.memory_space<vmem>>, vector<1x16x32xbf16>
    %37 = vector.shape_cast %36 : vector<1x16x32xbf16> to vector<16x32xbf16>
    %38 = vector.shape_cast %35 : vector<16x32xbf16> to vector<1x16x32xbf16>
    tpu.vector_store %arg17[%c1_24, %c0_25, %c0_26], %38 {strides = array<i32>} : memref<4x16x32xbf16, #tpu.memory_space<vmem>>, vector<1x16x32xbf16>,
    %39 = vector.extract_strided_slice %13 {offsets = [0, 32], sizes = [16, 32], strides = [1, 1]} : vector<16x128xf32> to vector<16x32xf32>
    %40 = arith.truncf %39 : vector<16x32xf32> to vector<16x32xbf16>
    %c1_27 = arith.constant 1 : index
    %c0_28 = arith.constant 0 : index
    %c0_29 = arith.constant 0 : index
    %41 = vector.load %arg18[%c1_27, %c0_28, %c0_29] : memref<4x16x32xbf16, #tpu.memory_space<vmem>>, vector<1x16x32xbf16>
    %42 = vector.shape_cast %41 : vector<1x16x32xbf16> to vector<16x32xbf16>
    %43 = vector.shape_cast %40 : vector<16x32xbf16> to vector<1x16x32xbf16>
    tpu.vector_store %arg18[%c1_27, %c0_28, %c0_29], %43 {strides = array<i32>} : memref<4x16x32xbf16, #tpu.memory_space<vmem>>, vector<1x16x32xbf16>,
    %44 = vector.extract_strided_slice %7 {offsets = [0, 64], sizes = [16, 32], strides = [1, 1]} : vector<16x128xf32> to vector<16x32xf32>
    %45 = arith.truncf %44 : vector<16x32xf32> to vector<16x32xbf16>
    %c2 = arith.constant 2 : index
    %c0_30 = arith.constant 0 : index
    %c0_31 = arith.constant 0 : index
    %46 = vector.load %arg16[%c2, %c0_30, %c0_31] : memref<4x16x32xbf16, #tpu.memory_space<vmem>>, vector<1x16x32xbf16>
    %47 = vector.shape_cast %46 : vector<1x16x32xbf16> to vector<16x32xbf16>
    %48 = vector.shape_cast %45 : vector<16x32xbf16> to vector<1x16x32xbf16>
    tpu.vector_store %arg16[%c2, %c0_30, %c0_31], %48 {strides = array<i32>} : memref<4x16x32xbf16, #tpu.memory_space<vmem>>, vector<1x16x32xbf16>,
    %49 = vector.extract_strided_slice %10 {offsets = [0, 64], sizes = [16, 32], strides = [1, 1]} : vector<16x128xf32> to vector<16x32xf32>
    %50 = arith.truncf %49 : vector<16x32xf32> to vector<16x32xbf16>
    %c2_32 = arith.constant 2 : index
    %c0_33 = arith.constant 0 : index
    %c0_34 = arith.constant 0 : index
    %51 = vector.load %arg17[%c2_32, %c0_33, %c0_34] : memref<4x16x32xbf16, #tpu.memory_space<vmem>>, vector<1x16x32xbf16>
    %52 = vector.shape_cast %51 : vector<1x16x32xbf16> to vector<16x32xbf16>
    %53 = vector.shape_cast %50 : vector<16x32xbf16> to vector<1x16x32xbf16>
    tpu.vector_store %arg17[%c2_32, %c0_33, %c0_34], %53 {strides = array<i32>} : memref<4x16x32xbf16, #tpu.memory_space<vmem>>, vector<1x16x32xbf16>,
    %54 = vector.extract_strided_slice %13 {offsets = [0, 64], sizes = [16, 32], strides = [1, 1]} : vector<16x128xf32> to vector<16x32xf32>
    %55 = arith.truncf %54 : vector<16x32xf32> to vector<16x32xbf16>
    %c2_35 = arith.constant 2 : index
    %c0_36 = arith.constant 0 : index
    %c0_37 = arith.constant 0 : index
    %56 = vector.load %arg18[%c2_35, %c0_36, %c0_37] : memref<4x16x32xbf16, #tpu.memory_space<vmem>>, vector<1x16x32xbf16>
    %57 = vector.shape_cast %56 : vector<1x16x32xbf16> to vector<16x32xbf16>
    %58 = vector.shape_cast %55 : vector<16x32xbf16> to vector<1x16x32xbf16>
    tpu.vector_store %arg18[%c2_35, %c0_36, %c0_37], %58 {strides = array<i32>} : memref<4x16x32xbf16, #tpu.memory_space<vmem>>, vector<1x16x32xbf16>,
    %59 = vector.extract_strided_slice %7 {offsets = [0, 96], sizes = [16, 32], strides = [1, 1]} : vector<16x128xf32> to vector<16x32xf32>
    %60 = arith.truncf %59 : vector<16x32xf32> to vector<16x32xbf16>
    %c3 = arith.constant 3 : index
    %c0_38 = arith.constant 0 : index
    %c0_39 = arith.constant 0 : index
    %61 = vector.load %arg16[%c3, %c0_38, %c0_39] : memref<4x16x32xbf16, #tpu.memory_space<vmem>>, vector<1x16x32xbf16>
    %62 = vector.shape_cast %61 : vector<1x16x32xbf16> to vector<16x32xbf16>
    %63 = vector.shape_cast %60 : vector<16x32xbf16> to vector<1x16x32xbf16>
    tpu.vector_store %arg16[%c3, %c0_38, %c0_39], %63 {strides = array<i32>} : memref<4x16x32xbf16, #tpu.memory_space<vmem>>, vector<1x16x32xbf16>,
    %64 = vector.extract_strided_slice %10 {offsets = [0, 96], sizes = [16, 32], strides = [1, 1]} : vector<16x128xf32> to vector<16x32xf32>
    %65 = arith.truncf %64 : vector<16x32xf32> to vector<16x32xbf16>
    %c3_40 = arith.constant 3 : index
    %c0_41 = arith.constant 0 : index
    %c0_42 = arith.constant 0 : index
    %66 = vector.load %arg17[%c3_40, %c0_41, %c0_42] : memref<4x16x32xbf16, #tpu.memory_space<vmem>>, vector<1x16x32xbf16>
    %67 = vector.shape_cast %66 : vector<1x16x32xbf16> to vector<16x32xbf16>
    %68 = vector.shape_cast %65 : vector<16x32xbf16> to vector<1x16x32xbf16>
    tpu.vector_store %arg17[%c3_40, %c0_41, %c0_42], %68 {strides = array<i32>} : memref<4x16x32xbf16, #tpu.memory_space<vmem>>, vector<1x16x32xbf16>,
    %69 = vector.extract_strided_slice %13 {offsets = [0, 96], sizes = [16, 32], strides = [1, 1]} : vector<16x128xf32> to vector<16x32xf32>
    %70 = arith.truncf %69 : vector<16x32xf32> to vector<16x32xbf16>
    %c3_43 = arith.constant 3 : index
    %c0_44 = arith.constant 0 : index
    %c0_45 = arith.constant 0 : index
    %71 = vector.load %arg18[%c3_43, %c0_44, %c0_45] : memref<4x16x32xbf16, #tpu.memory_space<vmem>>, vector<1x16x32xbf16>
    %72 = vector.shape_cast %71 : vector<1x16x32xbf16> to vector<16x32xbf16>
    %73 = vector.shape_cast %70 : vector<16x32xbf16> to vector<1x16x32xbf16>
    tpu.vector_store %arg18[%c3_43, %c0_44, %c0_45], %73 {strides = array<i32>} : memref<4x16x32xbf16, #tpu.memory_space<vmem>>, vector<1x16x32xbf16>,
    %c0_46 = arith.constant 0 : index
    %c0_47 = arith.constant 0 : index
    %c0_48 = arith.constant 0 : index
    %74 = vector.load %arg16[%c0_46, %c0_47, %c0_48] : memref<4x16x32xbf16, #tpu.memory_space<vmem>>, vector<4x16x32xbf16>
    %c0_49 = arith.constant 0 : index
    %c0_50 = arith.constant 0 : index
    %c0_51 = arith.constant 0 : index
    %75 = vector.load %arg17[%c0_49, %c0_50, %c0_51] : memref<4x16x32xbf16, #tpu.memory_space<vmem>>, vector<4x16x32xbf16>
    "tpu.trace_start"() <{level = 10 : i32, message = "hqd,hkd->hqk"}> : () -> ()
    %cst_52 = arith.constant dense<0.000000e+00> : vector<4x16x16xf32>
    %76 = tpu.matmul %74, %75, %cst_52 {dimension_numbers = #tpu.dot_dimension_numbers<[2], [2], [1], [1], [0, 0, 0, 1, 1, 1], [0], [0]>} : vector<4x16x32xbf16>, vector<4x16x32xbf16>, vector<4x16x16xf32> -> vector<4x16x16xf32>
    "tpu.trace_stop"() : () -> ()
    %cst_53 = arith.constant 0.176776692 : f32
    %77 = vector.broadcast %cst_53 : f32 to vector<4x16x16xf32>
    %78 = arith.mulf %76, %77 : vector<4x16x16xf32>
    %cst_54 = arith.constant dense<0xFF800000> : vector<4x16xf32>
    %79 = vector.multi_reduction <maximumf>, %78, %cst_54 [2] : vector<4x16x16xf32> to vector<4x16xf32>
    %80 = vector.shape_cast %79 : vector<4x16xf32> to vector<4x16x1xf32>
    %81 = vector.broadcast %80 : vector<4x16x1xf32> to vector<4x16x16xf32>
    %82 = arith.subf %78, %81 : vector<4x16x16xf32>
    %83 = math.exp %82 : vector<4x16x16xf32>
    %cst_55 = arith.constant dense<0.000000e+00> : vector<4x16xf32>
    %84 = vector.multi_reduction <add>, %83, %cst_55 [2] : vector<4x16x16xf32> to vector<4x16xf32>
    %85 = vector.shape_cast %84 : vector<4x16xf32> to vector<4x16x1xf32>
    %86 = tpu.reciprocal %85 {approx = true} : vector<4x16x1xf32> -> vector<4x16x1xf32>
    %87 = vector.broadcast %86 : vector<4x16x1xf32> to vector<4x16x16xf32>
    %88 = arith.mulf %83, %87 : vector<4x16x16xf32>
    %89 = arith.truncf %88 : vector<4x16x16xf32> to vector<4x16x16xbf16>
    %c0_56 = arith.constant 0 : index
    %c0_57 = arith.constant 0 : index
    %c0_58 = arith.constant 0 : index
    %90 = vector.load %arg18[%c0_56, %c0_57, %c0_58] : memref<4x16x32xbf16, #tpu.memory_space<vmem>>, vector<4x16x32xbf16>
    "tpu.trace_start"() <{level = 10 : i32, message = "hqk,hkd->hqd"}> : () -> ()
    %cst_59 = arith.constant dense<0.000000e+00> : vector<4x16x32xf32>
    %91 = tpu.matmul %89, %90, %cst_59 {dimension_numbers = #tpu.dot_dimension_numbers<[2], [1], [1], [2], [0, 0, 0, 1, 1, 2], [0], [0]>} : vector<4x16x16xbf16>, vector<4x16x32xbf16>, vector<4x16x32xf32> -> vector<4x16x32xf32>
    "tpu.trace_stop"() : () -> ()
    %92 = vector.extract_strided_slice %91 {offsets = [0, 0, 0], sizes = [1, 16, 32], strides = [1, 1, 1]} : vector<4x16x32xf32> to vector<1x16x32xf32>
    %93 = vector.shape_cast %92 : vector<1x16x32xf32> to vector<16x32xf32>
    %94 = arith.truncf %93 : vector<16x32xf32> to vector<16x32xbf16>
    %c0_60 = arith.constant 0 : index
    %c0_61 = arith.constant 0 : index
    %95 = vector.load %arg19[%c0_60, %c0_61] : memref<16x128xbf16, #tpu.memory_space<vmem>>, vector<16x32xbf16>
    tpu.vector_store %arg19[%c0_60, %c0_61], %94 {strides = array<i32>} : memref<16x128xbf16, #tpu.memory_space<vmem>>, vector<16x32xbf16>,
    %96 = vector.extract_strided_slice %91 {offsets = [1, 0, 0], sizes = [1, 16, 32], strides = [1, 1, 1]} : vector<4x16x32xf32> to vector<1x16x32xf32>
    %97 = vector.shape_cast %96 : vector<1x16x32xf32> to vector<16x32xf32>
    %98 = arith.truncf %97 : vector<16x32xf32> to vector<16x32xbf16>
    %c0_62 = arith.constant 0 : index
    %c32 = arith.constant 32 : index
    %99 = vector.load %arg19[%c0_62, %c32] : memref<16x128xbf16, #tpu.memory_space<vmem>>, vector<16x32xbf16>
    tpu.vector_store %arg19[%c0_62, %c32], %98 {strides = array<i32>} : memref<16x128xbf16, #tpu.memory_space<vmem>>, vector<16x32xbf16>,
    %100 = vector.extract_strided_slice %91 {offsets = [2, 0, 0], sizes = [1, 16, 32], strides = [1, 1, 1]} : vector<4x16x32xf32> to vector<1x16x32xf32>
    %101 = vector.shape_cast %100 : vector<1x16x32xf32> to vector<16x32xf32>
    %102 = arith.truncf %101 : vector<16x32xf32> to vector<16x32xbf16>
    %c0_63 = arith.constant 0 : index
    %c64 = arith.constant 64 : index
    %103 = vector.load %arg19[%c0_63, %c64] : memref<16x128xbf16, #tpu.memory_space<vmem>>, vector<16x32xbf16>
    tpu.vector_store %arg19[%c0_63, %c64], %102 {strides = array<i32>} : memref<16x128xbf16, #tpu.memory_space<vmem>>, vector<16x32xbf16>,
    %104 = vector.extract_strided_slice %91 {offsets = [3, 0, 0], sizes = [1, 16, 32], strides = [1, 1, 1]} : vector<4x16x32xf32> to vector<1x16x32xf32>
    %105 = vector.shape_cast %104 : vector<1x16x32xf32> to vector<16x32xf32>
    %106 = arith.truncf %105 : vector<16x32xf32> to vector<16x32xbf16>
    %c0_64 = arith.constant 0 : index
    %c96 = arith.constant 96 : index
    %107 = vector.load %arg19[%c0_64, %c96] : memref<16x128xbf16, #tpu.memory_space<vmem>>, vector<16x32xbf16>
    tpu.vector_store %arg19[%c0_64, %c96], %106 {strides = array<i32>} : memref<16x128xbf16, #tpu.memory_space<vmem>>, vector<16x32xbf16>,
    %c0_65 = arith.constant 0 : index
    %c0_66 = arith.constant 0 : index
    %108 = vector.load %arg19[%c0_65, %c0_66] : memref<16x128xbf16, #tpu.memory_space<vmem>>, vector<16x128xbf16>
    %c0_67 = arith.constant 0 : index
    %c0_68 = arith.constant 0 : index
    %c0_69 = arith.constant 0 : index
    %109 = vector.load %arg6[%c0_67, %c0_68, %c0_69] : memref<1x128x128xbf16, #tpu.memory_space<vmem>>, vector<1x128x128xbf16>
    %110 = vector.shape_cast %109 : vector<1x128x128xbf16> to vector<128x128xbf16>
    %cst_70 = arith.constant dense<0.000000e+00> : vector<16x128xf32>
    %111 = tpu.matmul %108, %110, %cst_70 {dimension_numbers = #tpu.dot_dimension_numbers<[1], [0], [0], [1], [0, 0, 1, 1], [], []>} : vector<16x128xbf16>, vector<128x128xbf16>, vector<16x128xf32> -> vector<16x128xf32>
    %112 = arith.addf %3, %111 : vector<16x128xf32>
    %c0_71 = arith.constant 0 : index
    %c0_72 = arith.constant 0 : index
    %c0_73 = arith.constant 0 : index
    %113 = vector.load %arg11[%c0_71, %c0_72, %c0_73] : memref<1x1x128xf32, #tpu.memory_space<vmem>>, vector<1x1x128xf32>
    %114 = vector.shape_cast %113 : vector<1x1x128xf32> to vector<1x128xf32>
    %c0_74 = arith.constant 0 : index
    %c0_75 = arith.constant 0 : index
    %c0_76 = arith.constant 0 : index
    %115 = vector.load %arg12[%c0_74, %c0_75, %c0_76] : memref<1x1x128xf32, #tpu.memory_space<vmem>>, vector<1x1x128xf32>
    %116 = vector.shape_cast %115 : vector<1x1x128xf32> to vector<1x128xf32>
    %cst_77 = arith.constant dense<0.000000e+00> : vector<16xf32>
    %117 = vector.multi_reduction <add>, %112, %cst_77 [1] : vector<16x128xf32> to vector<16xf32>
    %118 = vector.shape_cast %117 : vector<16xf32> to vector<16x1xf32>
    %cst_78 = arith.constant 1.280000e+02 : f32
    %119 = vector.broadcast %cst_78 : f32 to vector<16x1xf32>
    %120 = arith.divf %118, %119 : vector<16x1xf32>
    %121 = vector.broadcast %120 : vector<16x1xf32> to vector<16x128xf32>
    %122 = arith.subf %112, %121 : vector<16x128xf32>
    %123 = arith.mulf %122, %122 : vector<16x128xf32>
    %cst_79 = arith.constant dense<0.000000e+00> : vector<16xf32>
    %124 = vector.multi_reduction <add>, %123, %cst_79 [1] : vector<16x128xf32> to vector<16xf32>
    %125 = vector.shape_cast %124 : vector<16xf32> to vector<16x1xf32>
    %cst_80 = arith.constant 1.280000e+02 : f32
    %126 = vector.broadcast %cst_80 : f32 to vector<16x1xf32>
    %127 = arith.divf %125, %126 : vector<16x1xf32>
    %cst_81 = arith.constant 9.99999974E-6 : f32
    %128 = vector.broadcast %cst_81 : f32 to vector<16x1xf32>
    %129 = arith.addf %127, %128 : vector<16x1xf32>
    %130 = math.rsqrt %129 : vector<16x1xf32>
    %131 = vector.broadcast %130 : vector<16x1xf32> to vector<16x128xf32>
    %132 = arith.mulf %122, %131 : vector<16x128xf32>
    %133 = vector.broadcast %114 : vector<1x128xf32> to vector<16x128xf32>
    %134 = arith.mulf %132, %133 : vector<16x128xf32>
    %135 = vector.broadcast %116 : vector<1x128xf32> to vector<16x128xf32>
    %136 = arith.addf %134, %135 : vector<16x128xf32>
    %137 = arith.truncf %136 : vector<16x128xf32> to vector<16x128xbf16>
    %c0_82 = arith.constant 0 : index
    %c0_83 = arith.constant 0 : index
    %c0_84 = arith.constant 0 : index
    %138 = vector.load %arg7[%c0_82, %c0_83, %c0_84] : memref<1x128x512xbf16, #tpu.memory_space<vmem>>, vector<1x128x512xbf16>
    %139 = vector.shape_cast %138 : vector<1x128x512xbf16> to vector<128x512xbf16>
    %cst_85 = arith.constant dense<0.000000e+00> : vector<16x512xf32>
    %140 = tpu.matmul %137, %139, %cst_85 {dimension_numbers = #tpu.dot_dimension_numbers<[1], [0], [0], [1], [0, 0, 1, 1], [], []>} : vector<16x128xbf16>, vector<128x512xbf16>, vector<16x512xf32> -> vector<16x512xf32>
    %c0_86 = arith.constant 0 : index
    %c0_87 = arith.constant 0 : index
    %c0_88 = arith.constant 0 : index
    %141 = vector.load %arg8[%c0_86, %c0_87, %c0_88] : memref<1x1x512xf32, #tpu.memory_space<vmem>>, vector<1x1x512xf32>
    %142 = vector.shape_cast %141 : vector<1x1x512xf32> to vector<1x512xf32>
    %143 = vector.broadcast %142 : vector<1x512xf32> to vector<16x512xf32>
    %144 = arith.addf %140, %143 : vector<16x512xf32>
    %cst_89 = arith.constant 0.000000e+00 : f32
    %145 = vector.broadcast %cst_89 : f32 to vector<16x512xf32>
    %146 = arith.maximumf %144, %145 : vector<16x512xf32>
    %147 = arith.truncf %146 : vector<16x512xf32> to vector<16x512xbf16>
    %c0_90 = arith.constant 0 : index
    %c0_91 = arith.constant 0 : index
    %c0_92 = arith.constant 0 : index
    %148 = vector.load %arg9[%c0_90, %c0_91, %c0_92] : memref<1x512x128xbf16, #tpu.memory_space<vmem>>, vector<1x512x128xbf16>
    %149 = vector.shape_cast %148 : vector<1x512x128xbf16> to vector<512x128xbf16>
    %cst_93 = arith.constant dense<0.000000e+00> : vector<16x128xf32>
    %150 = tpu.matmul %147, %149, %cst_93 {dimension_numbers = #tpu.dot_dimension_numbers<[1], [0], [0], [1], [0, 0, 1, 1], [], []>} : vector<16x512xbf16>, vector<512x128xbf16>, vector<16x128xf32> -> vector<16x128xf32>
    %c0_94 = arith.constant 0 : index
    %c0_95 = arith.constant 0 : index
    %c0_96 = arith.constant 0 : index
    %151 = vector.load %arg10[%c0_94, %c0_95, %c0_96] : memref<1x1x128xf32, #tpu.memory_space<vmem>>, vector<1x1x128xf32>
    %152 = vector.shape_cast %151 : vector<1x1x128xf32> to vector<1x128xf32>
    %153 = vector.broadcast %152 : vector<1x128xf32> to vector<16x128xf32>
    %154 = arith.addf %150, %153 : vector<16x128xf32>
    %155 = arith.addf %136, %154 : vector<16x128xf32>
    %c0_97 = arith.constant 0 : index
    %c0_98 = arith.constant 0 : index
    %c0_99 = arith.constant 0 : index
    %156 = vector.load %arg13[%c0_97, %c0_98, %c0_99] : memref<1x1x128xf32, #tpu.memory_space<vmem>>, vector<1x1x128xf32>
    %157 = vector.shape_cast %156 : vector<1x1x128xf32> to vector<1x128xf32>
    %c0_100 = arith.constant 0 : index
    %c0_101 = arith.constant 0 : index
    %c0_102 = arith.constant 0 : index
    %158 = vector.load %arg14[%c0_100, %c0_101, %c0_102] : memref<1x1x128xf32, #tpu.memory_space<vmem>>, vector<1x1x128xf32>
    %159 = vector.shape_cast %158 : vector<1x1x128xf32> to vector<1x128xf32>
    %cst_103 = arith.constant dense<0.000000e+00> : vector<16xf32>
    %160 = vector.multi_reduction <add>, %155, %cst_103 [1] : vector<16x128xf32> to vector<16xf32>
    %161 = vector.shape_cast %160 : vector<16xf32> to vector<16x1xf32>
    %cst_104 = arith.constant 1.280000e+02 : f32
    %162 = vector.broadcast %cst_104 : f32 to vector<16x1xf32>
    %163 = arith.divf %161, %162 : vector<16x1xf32>
    %164 = vector.broadcast %163 : vector<16x1xf32> to vector<16x128xf32>
    %165 = arith.subf %155, %164 : vector<16x128xf32>
    %166 = arith.mulf %165, %165 : vector<16x128xf32>
    %cst_105 = arith.constant dense<0.000000e+00> : vector<16xf32>
    %167 = vector.multi_reduction <add>, %166, %cst_105 [1] : vector<16x128xf32> to vector<16xf32>
    %168 = vector.shape_cast %167 : vector<16xf32> to vector<16x1xf32>
    %cst_106 = arith.constant 1.280000e+02 : f32
    %169 = vector.broadcast %cst_106 : f32 to vector<16x1xf32>
    %170 = arith.divf %168, %169 : vector<16x1xf32>
    %cst_107 = arith.constant 9.99999974E-6 : f32
    %171 = vector.broadcast %cst_107 : f32 to vector<16x1xf32>
    %172 = arith.addf %170, %171 : vector<16x1xf32>
    %173 = math.rsqrt %172 : vector<16x1xf32>
    %174 = vector.broadcast %173 : vector<16x1xf32> to vector<16x128xf32>
    %175 = arith.mulf %165, %174 : vector<16x128xf32>
    %176 = vector.broadcast %157 : vector<1x128xf32> to vector<16x128xf32>
    %177 = arith.mulf %175, %176 : vector<16x128xf32>
    %178 = vector.broadcast %159 : vector<1x128xf32> to vector<16x128xf32>
    %179 = arith.addf %177, %178 : vector<16x128xf32>
    %c0_108 = arith.constant 0 : index
    %c0_109 = arith.constant 0 : index
    %180 = vector.load %arg20[%c0_108, %c0_109] : memref<16x128xf32, #tpu.memory_space<vmem>>, vector<16x128xf32>
    tpu.vector_store %arg20[%c0_108, %c0_109], %179 {strides = array<i32>} : memref<16x128xf32, #tpu.memory_space<vmem>>, vector<16x128xf32>,
    %c0_110 = arith.constant 0 : index
    %c0_111 = arith.constant 0 : index
    %c0_112 = arith.constant 0 : index
    %181 = vector.load %arg15[%c0_110, %c0_111, %c0_112] : memref<1x16x128xf32, #tpu.memory_space<vmem>>, vector<1x16x128xf32>
    %182 = vector.shape_cast %181 : vector<1x16x128xf32> to vector<16x128xf32>
    %183 = vector.shape_cast %179 : vector<16x128xf32> to vector<1x16x128xf32>
    tpu.vector_store %arg15[%c0_110, %c0_111, %c0_112], %183 {strides = array<i32>} : memref<1x16x128xf32, #tpu.memory_space<vmem>>, vector<1x16x128xf32>,
    return
  }
  func.func @transform_0(%arg0: i32, %arg1: i32) -> (i32, i32, i32) {
    %c0_i32 = arith.constant 0 : i32
    %c0_i32_0 = arith.constant 0 : i32
    %c0_i32_1 = arith.constant 0 : i32
    return %arg0, %c0_i32, %c0_i32_0 : i32, i32, i32
  }
  func.func @transform_1(%arg0: i32, %arg1: i32) -> (i32, i32, i32) {
    %c0_i32 = arith.constant 0 : i32
    %c0_i32_0 = arith.constant 0 : i32
    %c0_i32_1 = arith.constant 0 : i32
    return %arg1, %c0_i32, %c0_i32_0 : i32, i32, i32
  }
  func.func @transform_2(%arg0: i32, %arg1: i32) -> (i32, i32, i32) {
    %c0_i32 = arith.constant 0 : i32
    %c0_i32_0 = arith.constant 0 : i32
    %c0_i32_1 = arith.constant 0 : i32
    return %arg1, %c0_i32, %c0_i32_0 : i32, i32, i32
  }
  func.func @transform_3(%arg0: i32, %arg1: i32) -> (i32, i32, i32) {
    %c0_i32 = arith.constant 0 : i32
    %c0_i32_0 = arith.constant 0 : i32
    %c0_i32_1 = arith.constant 0 : i32
    return %arg1, %c0_i32, %c0_i32_0 : i32, i32, i32
  }
  func.func @transform_4(%arg0: i32, %arg1: i32) -> (i32, i32, i32) {
    %c0_i32 = arith.constant 0 : i32
    %c0_i32_0 = arith.constant 0 : i32
    %c0_i32_1 = arith.constant 0 : i32
    return %arg1, %c0_i32, %c0_i32_0 : i32, i32, i32
  }
  func.func @transform_5(%arg0: i32, %arg1: i32) -> (i32, i32, i32) {
    %c0_i32 = arith.constant 0 : i32
    %c0_i32_0 = arith.constant 0 : i32
    %c0_i32_1 = arith.constant 0 : i32
    return %arg1, %c0_i32, %c0_i32_0 : i32, i32, i32
  }
  func.func @transform_6(%arg0: i32, %arg1: i32) -> (i32, i32, i32) {
    %c0_i32 = arith.constant 0 : i32
    %c0_i32_0 = arith.constant 0 : i32
    %c0_i32_1 = arith.constant 0 : i32
    return %arg1, %c0_i32, %c0_i32_0 : i32, i32, i32
  }
  func.func @transform_7(%arg0: i32, %arg1: i32) -> (i32, i32, i32) {
    %c0_i32 = arith.constant 0 : i32
    %c0_i32_0 = arith.constant 0 : i32
    %c0_i32_1 = arith.constant 0 : i32
    return %arg1, %c0_i32, %c0_i32_0 : i32, i32, i32
  }
  func.func @transform_8(%arg0: i32, %arg1: i32) -> (i32, i32, i32) {
    %c0_i32 = arith.constant 0 : i32
    %c0_i32_0 = arith.constant 0 : i32
    %c0_i32_1 = arith.constant 0 : i32
    return %arg1, %c0_i32, %c0_i32_0 : i32, i32, i32
  }
  func.func @transform_9(%arg0: i32, %arg1: i32) -> (i32, i32, i32) {
    %c0_i32 = arith.constant 0 : i32
    %c0_i32_0 = arith.constant 0 : i32
    %c0_i32_1 = arith.constant 0 : i32
    return %arg1, %c0_i32, %c0_i32_0 : i32, i32, i32
  }
  func.func @transform_10(%arg0: i32, %arg1: i32) -> (i32, i32, i32) {
    %c0_i32 = arith.constant 0 : i32
    %c0_i32_0 = arith.constant 0 : i32
    %c0_i32_1 = arith.constant 0 : i32
    return %arg1, %c0_i32, %c0_i32_0 : i32, i32, i32
  }
  func.func @transform_11(%arg0: i32, %arg1: i32) -> (i32, i32, i32) {
    %c0_i32 = arith.constant 0 : i32
    %c0_i32_0 = arith.constant 0 : i32
    %c0_i32_1 = arith.constant 0 : i32
    return %arg1, %c0_i32, %c0_i32_0 : i32, i32, i32
  }
  func.func @transform_12(%arg0: i32, %arg1: i32) -> (i32, i32, i32) {
    %c0_i32 = arith.constant 0 : i32
    %c0_i32_0 = arith.constant 0 : i32
    %c0_i32_1 = arith.constant 0 : i32
    return %arg1, %c0_i32, %c0_i32_0 : i32, i32, i32
  }
  func.func @transform_13(%arg0: i32, %arg1: i32) -> (i32, i32, i32) {
    %c0_i32 = arith.constant 0 : i32
    %c0_i32_0 = arith.constant 0 : i32
    %c0_i32_1 = arith.constant 0 : i32
    return %arg0, %c0_i32, %c0_i32_0 : i32, i32, i32
  }
}

</mosaic_0001>

<llo_original>
// kernel: tpu_custom_call.1
$region0: #{tpu_custom_call.1}
  #allocation0 [shape = 'u32[]', space=smem, size = 0x4, offset = 0x4, fixed_abs, tag = 'smem constant byte address 0x4 - core index']
  #allocation1 [shape = 'u32[144,128]{1,0:T(1,128)}', space=vmem, size = 0x12000, scoped, tag = 'internal scratch']
  #allocation2 [shape = 'bf16[4,16,32]{2,1,0:T(16,128)(2,1)}', space=vmem, size = 0x4000, scoped, tag = 'scratch operand']
  #allocation3 [shape = 'bf16[4,16,32]{2,1,0:T(16,128)(2,1)}', space=vmem, size = 0x4000, scoped, tag = 'scratch operand']
  #allocation4 [shape = 'bf16[4,16,32]{2,1,0:T(16,128)(2,1)}', space=vmem, size = 0x4000, scoped, tag = 'scratch operand']
  #allocation5 [shape = 'bf16[16,128]{1,0:T(16,128)(2,1)}', space=vmem, size = 0x1000, scoped, tag = 'scratch operand']
  #allocation6 [shape = 'f32[16,128]{1,0:T(8,128)}', space=vmem, size = 0x2000, scoped, tag = 'scratch operand']
  %s0 = inlined_call_operand.hbm [shape: f32[2,16,128], index: 0, kind: input, shape index: {}]
  %s1 = inlined_call_operand.hbm [shape: bf16[2,128,128], index: 1, kind: input, shape index: {}]
  %s2 = inlined_call_operand.hbm [shape: bf16[2,128,128], index: 2, kind: input, shape index: {}]
  %s3 = inlined_call_operand.hbm [shape: bf16[2,128,128], index: 3, kind: input, shape index: {}]
  %s4 = inlined_call_operand.hbm [shape: bf16[2,128,128], index: 4, kind: input, shape index: {}]
  %s5 = inlined_call_operand.hbm [shape: bf16[2,128,512], index: 5, kind: input, shape index: {}]
  %s6 = inlined_call_operand.vmem [shape: f32[2,1,512], index: 6, kind: input, shape index: {}]
  %s7 = inlined_call_operand.hbm [shape: bf16[2,512,128], index: 7, kind: input, shape index: {}]
  %s8 = inlined_call_operand.vmem [shape: f32[2,1,128], index: 8, kind: input, shape index: {}]
  %s9 = inlined_call_operand.vmem [shape: f32[2,1,128], index: 9, kind: input, shape index: {}]
  %s10 = inlined_call_operand.vmem [shape: f32[2,1,128], index: 10, kind: input, shape index: {}]
  %s11 = inlined_call_operand.vmem [shape: f32[2,1,128], index: 11, kind: input, shape index: {}]
  %s12 = inlined_call_operand.vmem [shape: f32[2,1,128], index: 12, kind: input, shape index: {}]
  %s13 = inlined_call_operand.hbm [shape: f32[2,16,128], index: 13, kind: output, shape index: {}]
  %s14 = sld [smem:[#allocation0]]
  $region117: #{tpu_custom_call.1} parent=0
    _
  %s16 = ssub.s32 1, %s14
  %s17 = scalar_select 0, %s16, %s14
  $region1: #{tpu_custom_call.1} parent=0
    #allocation7 [shape = 'u8[16384]{0}', space=vmem, size = 0x4000, scoped, tag = 'input window, operand 0']
    #allocation8 [shape = 's32[2]{0}', space=sflag, size = 0x8, scoped, tag = 'scoped memory for tpu_custom_call.1']
    #allocation9 [shape = 's32[2]{0}', space=sflag, size = 0x8, scoped, tag = 'scoped memory for tpu_custom_call.1']
    #allocation10 [shape = 'u8[65536]{0}', space=vmem, size = 0x10000, scoped, tag = 'input window, operand 1']
    #allocation11 [shape = 's32[2]{0}', space=sflag, size = 0x8, scoped, tag = 'scoped memory for tpu_custom_call.1']
    #allocation12 [shape = 'u8[65536]{0}', space=vmem, size = 0x10000, scoped, tag = 'input window, operand 2']
    #allocation13 [shape = 'u8[65536]{0}', space=vmem, size = 0x10000, scoped, tag = 'input window, operand 3']
    #allocation14 [shape = 's32[2]{0}', space=sflag, size = 0x8, scoped, tag = 'scoped memory for tpu_custom_call.1']
    #allocation15 [shape = 'u8[65536]{0}', space=vmem, size = 0x10000, scoped, tag = 'input window, operand 4']
    #allocation16 [shape = 'u8[262144]{0}', space=vmem, size = 0x40000, scoped, tag = 'input window, operand 5']
    #allocation17 [shape = 's32[2]{0}', space=sflag, size = 0x8, scoped, tag = 'scoped memory for tpu_custom_call.1']
    #allocation18 [shape = 'u8[262144]{0}', space=vmem, size = 0x40000, scoped, tag = 'input window, operand 7']
    #allocation19 [shape = 'u8[16384]{0}', space=vmem, size = 0x4000, scoped, tag = 'output window, operand 0']
    %18 = vsyncpa [#allocation8], 0
    %s19 = scalar_lea.sflag [#allocation8], 1
    %20 = vsyncpa %s19, 0
    %21 = vsyncpa [#allocation11], 0
    %s22 = scalar_lea.sflag [#allocation11], 1
    %23 = vsyncpa %s22, 0
    %24 = vsyncpa [#allocation14], 0
    %s25 = scalar_lea.sflag [#allocation14], 1
    %26 = vsyncpa %s25, 0
    %27 = vsyncpa [#allocation17], 0
    %s28 = scalar_lea.sflag [#allocation17], 1
    %29 = vsyncpa %s28, 0
    %30 = vsyncpa [#allocation9], 0
    %s31 = scalar_lea.sflag [#allocation9], 1
    %32 = vsyncpa %s31, 0
    loop: start=0, step=1, limit=6
    $region2: #{tpu_custom_call.1} parent=1 // loop_pre_header
      _
    $region3: #{tpu_custom_call.1} parent=1 // loop_header
      %s34 = sphi 0, %s38
      %p35 = scmp.ge.s32.totalorder %s34, 6
      %s41 = sphi 0, %s53
      %s42 = sphi 0, %s49
      %s43 = sphi 0, %s41
      %s44 = sphi 0, %s42
      %s45 = sphi 0, %s43
      %s46 = sphi 0, %s44
      %s56 = sphi 0, %s58
      %s59 = sphi 0, %s56
      %s60 = sphi 0, %s59
      %s76 = sphi 0, %s60
      %s82 = sphi 0, %s84
      %s85 = sphi 0, %s82
      %s86 = sphi 0, %s85
      %s102 = sphi 0, %s86
      %s108 = sphi 0, %s110
      %s111 = sphi 0, %s108
      %s112 = sphi 0, %s111
      %s128 = sphi 0, %s112
      %s134 = sphi 0, %s136
      %s137 = sphi 0, %s134
      %s138 = sphi 0, %s137
      %s154 = sphi 0, %s138
      %s160 = sphi 0, %s162
      %s163 = sphi 0, %s160
      %s164 = sphi 0, %s163
      %s180 = sphi 0, %s164
      %s186 = sphi 0, %s188
      %s189 = sphi 0, %s186
      %s190 = sphi 0, %s189
      %s206 = sphi 0, %s190
      %s212 = sphi 0, %s214
      %s215 = sphi 0, %s212
      %s216 = sphi 0, %s215
      %s232 = sphi 0, %s216
      %s238 = sphi 0, %s240
      %s241 = sphi 0, %s238
      %s242 = sphi 0, %s241
      %s258 = sphi 0, %s242
      %s264 = sphi 0, %s266
      %s267 = sphi 0, %s264
      %s268 = sphi 0, %s267
      %s284 = sphi 0, %s268
      %s290 = sphi 0, %s292
      %s293 = sphi 0, %s290
      %s294 = sphi 0, %s293
      %s310 = sphi 0, %s294
      %s316 = sphi 0, %s318
      %s319 = sphi 0, %s316
      %s320 = sphi 0, %s319
      %s336 = sphi 0, %s320
      %s342 = sphi 0, %s344
      %s345 = sphi 0, %s342
      %s346 = sphi 0, %s345
      %s362 = sphi 0, %s346
      %s368 = sphi 0, %s370
      %s371 = sphi 0, %s368
      %s372 = sphi 0, %s371
      %s388 = sphi 0, %s372
      %s394 = sphi 0, %s396
      %s397 = sphi 0, %s394
      %s398 = sphi 0, %s397
      %s414 = sphi 0, %s398
    $region4: #{tpu_custom_call.1} parent=1 // loop_header_branch
      %37 = sbr.rel (%p35) target = $region8
    $region5: #{tpu_custom_call.1} parent=1 // loop_body
      %s39 = ssub.s32 %s34, 1
      %s40 = ssub.s32 %s34, 2
      %s47 = sadd.s32 1, %s42
      %p48 = scmp.ge.s32.totalorder %s47, 2
      %s49 = scalar_select %p48, 0, %s47
      %s50 = sadd.s32 1, %s41
      %s51 = scalar_select %p48, %s50, %s41
      %p52 = scmp.ge.s32.totalorder %s51, 2
      %s53 = scalar_select %p52, 0, %s51
      %s54 = ssub.s32 %s41, %s53
      %p55 = scmp.eq.s32.totalorder %s54, 0
      %s57 = sadd.s32 %s56, 1
      %s58 = scalar_select %p55, %s56, %s57
      %p61 = pneg %p55
      %p62 = scmp.eq.s32.totalorder %s34, 3
      %p63 = por %p61, %p62
      %p64 = scmp.ne.s32.totalorder %s56, %s59
      %p65 = scmp.eq.s32.totalorder %s34, 0
      %p66 = por %p64, %p65
      %p67 = scmp.ne.s32.totalorder %s56, %s59
      %p68 = scmp.eq.s32.totalorder %s39, 3
      %p69 = por %p67, %p68
      %p70 = scmp.ne.s32.totalorder %s59, %s60
      %p71 = scmp.eq.s32.totalorder %s39, 0
      %p72 = por %p70, %p71
      %p73 = scmp.ne.s32.totalorder %s59, %s60
      %p74 = scmp.eq.s32.totalorder %s40, 3
      %p75 = por %p73, %p74
      %p77 = scmp.ne.s32.totalorder %s60, %s76
      %p78 = scmp.eq.s32.totalorder %s40, 0
      %p79 = por %p77, %p78
      %s80 = ssub.s32 %s42, %s49
      %p81 = scmp.eq.s32.totalorder %s80, 0
      %s83 = sadd.s32 %s82, 1
      %s84 = scalar_select %p81, %s82, %s83
      %p87 = pneg %p81
      %p88 = scmp.eq.s32.totalorder %s34, 3
      %p89 = por %p87, %p88
      %p90 = scmp.ne.s32.totalorder %s82, %s85
      %p91 = scmp.eq.s32.totalorder %s34, 0
      %p92 = por %p90, %p91
      %p93 = scmp.ne.s32.totalorder %s82, %s85
      %p94 = scmp.eq.s32.totalorder %s39, 3
      %p95 = por %p93, %p94
      %p96 = scmp.ne.s32.totalorder %s85, %s86
      %p97 = scmp.eq.s32.totalorder %s39, 0
      %p98 = por %p96, %p97
      %p99 = scmp.ne.s32.totalorder %s85, %s86
      %p100 = scmp.eq.s32.totalorder %s40, 3
      %p101 = por %p99, %p100
      %p103 = scmp.ne.s32.totalorder %s86, %s102
      %p104 = scmp.eq.s32.totalorder %s40, 0
      %p105 = por %p103, %p104
      %s106 = ssub.s32 %s42, %s49
      %p107 = scmp.eq.s32.totalorder %s106, 0
      %s109 = sadd.s32 %s108, 1
      %s110 = scalar_select %p107, %s108, %s109
      %p113 = pneg %p107
      %p114 = scmp.eq.s32.totalorder %s34, 3
      %p115 = por %p113, %p114
      %p116 = scmp.ne.s32.totalorder %s108, %s111
      %p117 = scmp.eq.s32.totalorder %s34, 0
      %p118 = por %p116, %p117
      %p119 = scmp.ne.s32.totalorder %s108, %s111
      %p120 = scmp.eq.s32.totalorder %s39, 3
      %p121 = por %p119, %p120
      %p122 = scmp.ne.s32.totalorder %s111, %s112
      %p123 = scmp.eq.s32.totalorder %s39, 0
      %p124 = por %p122, %p123
      %p125 = scmp.ne.s32.totalorder %s111, %s112
      %p126 = scmp.eq.s32.totalorder %s40, 3
      %p127 = por %p125, %p126
      %p129 = scmp.ne.s32.totalorder %s112, %s128
      %p130 = scmp.eq.s32.totalorder %s40, 0
      %p131 = por %p129, %p130
      %s132 = ssub.s32 %s42, %s49
      %p133 = scmp.eq.s32.totalorder %s132, 0
      %s135 = sadd.s32 %s134, 1
      %s136 = scalar_select %p133, %s134, %s135
      %p139 = pneg %p133
      %p140 = scmp.eq.s32.totalorder %s34, 3
      %p141 = por %p139, %p140
      %p142 = scmp.ne.s32.totalorder %s134, %s137
      %p143 = scmp.eq.s32.totalorder %s34, 0
      %p144 = por %p142, %p143
      %p145 = scmp.ne.s32.totalorder %s134, %s137
      %p146 = scmp.eq.s32.totalorder %s39, 3
      %p147 = por %p145, %p146
      %p148 = scmp.ne.s32.totalorder %s137, %s138
      %p149 = scmp.eq.s32.totalorder %s39, 0
      %p150 = por %p148, %p149
      %p151 = scmp.ne.s32.totalorder %s137, %s138
      %p152 = scmp.eq.s32.totalorder %s40, 3
      %p153 = por %p151, %p152
      %p155 = scmp.ne.s32.totalorder %s138, %s154
      %p156 = scmp.eq.s32.totalorder %s40, 0
      %p157 = por %p155, %p156
      %s158 = ssub.s32 %s42, %s49
      %p159 = scmp.eq.s32.totalorder %s158, 0
      %s161 = sadd.s32 %s160, 1
      %s162 = scalar_select %p159, %s160, %s161
      %p165 = pneg %p159
      %p166 = scmp.eq.s32.totalorder %s34, 3
      %p167 = por %p165, %p166
      %p168 = scmp.ne.s32.totalorder %s160, %s163
      %p169 = scmp.eq.s32.totalorder %s34, 0
      %p170 = por %p168, %p169
      %p171 = scmp.ne.s32.totalorder %s160, %s163
      %p172 = scmp.eq.s32.totalorder %s39, 3
      %p173 = por %p171, %p172
      %p174 = scmp.ne.s32.totalorder %s163, %s164
      %p175 = scmp.eq.s32.totalorder %s39, 0
      %p176 = por %p174, %p175
      %p177 = scmp.ne.s32.totalorder %s163, %s164
      %p178 = scmp.eq.s32.totalorder %s40, 3
      %p179 = por %p177, %p178
      %p181 = scmp.ne.s32.totalorder %s164, %s180
      %p182 = scmp.eq.s32.totalorder %s40, 0
      %p183 = por %p181, %p182
      %s184 = ssub.s32 %s42, %s49
      %p185 = scmp.eq.s32.totalorder %s184, 0
      %s187 = sadd.s32 %s186, 1
      %s188 = scalar_select %p185, %s186, %s187
      %p191 = pneg %p185
      %p192 = scmp.eq.s32.totalorder %s34, 3
      %p193 = por %p191, %p192
      %p194 = scmp.ne.s32.totalorder %s186, %s189
      %p195 = scmp.eq.s32.totalorder %s34, 0
      %p196 = por %p194, %p195
      %p197 = scmp.ne.s32.totalorder %s186, %s189
      %p198 = scmp.eq.s32.totalorder %s39, 3
      %p199 = por %p197, %p198
      %p200 = scmp.ne.s32.totalorder %s189, %s190
      %p201 = scmp.eq.s32.totalorder %s39, 0
      %p202 = por %p200, %p201
      %p203 = scmp.ne.s32.totalorder %s189, %s190
      %p204 = scmp.eq.s32.totalorder %s40, 3
      %p205 = por %p203, %p204
      %p207 = scmp.ne.s32.totalorder %s190, %s206
      %p208 = scmp.eq.s32.totalorder %s40, 0
      %p209 = por %p207, %p208
      %s210 = ssub.s32 %s42, %s49
      %p211 = scmp.eq.s32.totalorder %s210, 0
      %s213 = sadd.s32 %s212, 1
      %s214 = scalar_select %p211, %s212, %s213
      %p217 = pneg %p211
      %p218 = scmp.eq.s32.totalorder %s34, 3
      %p219 = por %p217, %p218
      %p220 = scmp.ne.s32.totalorder %s212, %s215
      %p221 = scmp.eq.s32.totalorder %s34, 0
      %p222 = por %p220, %p221
      %p223 = scmp.ne.s32.totalorder %s212, %s215
      %p224 = scmp.eq.s32.totalorder %s39, 3
      %p225 = por %p223, %p224
      %p226 = scmp.ne.s32.totalorder %s215, %s216
      %p227 = scmp.eq.s32.totalorder %s39, 0
      %p228 = por %p226, %p227
      %p229 = scmp.ne.s32.totalorder %s215, %s216
      %p230 = scmp.eq.s32.totalorder %s40, 3
      %p231 = por %p229, %p230
      %p233 = scmp.ne.s32.totalorder %s216, %s232
      %p234 = scmp.eq.s32.totalorder %s40, 0
      %p235 = por %p233, %p234
      %s236 = ssub.s32 %s42, %s49
      %p237 = scmp.eq.s32.totalorder %s236, 0
      %s239 = sadd.s32 %s238, 1
      %s240 = scalar_select %p237, %s238, %s239
      %p243 = pneg %p237
      %p244 = scmp.eq.s32.totalorder %s34, 3
      %p245 = por %p243, %p244
      %p246 = scmp.ne.s32.totalorder %s238, %s241
      %p247 = scmp.eq.s32.totalorder %s34, 0
      %p248 = por %p246, %p247
      %p249 = scmp.ne.s32.totalorder %s238, %s241
      %p250 = scmp.eq.s32.totalorder %s39, 3
      %p251 = por %p249, %p250
      %p252 = scmp.ne.s32.totalorder %s241, %s242
      %p253 = scmp.eq.s32.totalorder %s39, 0
      %p254 = por %p252, %p253
      %p255 = scmp.ne.s32.totalorder %s241, %s242
      %p256 = scmp.eq.s32.totalorder %s40, 3
      %p257 = por %p255, %p256
      %p259 = scmp.ne.s32.totalorder %s242, %s258
      %p260 = scmp.eq.s32.totalorder %s40, 0
      %p261 = por %p259, %p260
      %s262 = ssub.s32 %s42, %s49
      %p263 = scmp.eq.s32.totalorder %s262, 0
      %s265 = sadd.s32 %s264, 1
      %s266 = scalar_select %p263, %s264, %s265
      %p269 = pneg %p263
      %p270 = scmp.eq.s32.totalorder %s34, 3
      %p271 = por %p269, %p270
      %p272 = scmp.ne.s32.totalorder %s264, %s267
      %p273 = scmp.eq.s32.totalorder %s34, 0
      %p274 = por %p272, %p273
      %p275 = scmp.ne.s32.totalorder %s264, %s267
      %p276 = scmp.eq.s32.totalorder %s39, 3
      %p277 = por %p275, %p276
      %p278 = scmp.ne.s32.totalorder %s267, %s268
      %p279 = scmp.eq.s32.totalorder %s39, 0
      %p280 = por %p278, %p279
      %p281 = scmp.ne.s32.totalorder %s267, %s268
      %p282 = scmp.eq.s32.totalorder %s40, 3
      %p283 = por %p281, %p282
      %p285 = scmp.ne.s32.totalorder %s268, %s284
      %p286 = scmp.eq.s32.totalorder %s40, 0
      %p287 = por %p285, %p286
      %s288 = ssub.s32 %s42, %s49
      %p289 = scmp.eq.s32.totalorder %s288, 0
      %s291 = sadd.s32 %s290, 1
      %s292 = scalar_select %p289, %s290, %s291
      %p295 = pneg %p289
      %p296 = scmp.eq.s32.totalorder %s34, 3
      %p297 = por %p295, %p296
      %p298 = scmp.ne.s32.totalorder %s290, %s293
      %p299 = scmp.eq.s32.totalorder %s34, 0
      %p300 = por %p298, %p299
      %p301 = scmp.ne.s32.totalorder %s290, %s293
      %p302 = scmp.eq.s32.totalorder %s39, 3
      %p303 = por %p301, %p302
      %p304 = scmp.ne.s32.totalorder %s293, %s294
      %p305 = scmp.eq.s32.totalorder %s39, 0
      %p306 = por %p304, %p305
      %p307 = scmp.ne.s32.totalorder %s293, %s294
      %p308 = scmp.eq.s32.totalorder %s40, 3
      %p309 = por %p307, %p308
      %p311 = scmp.ne.s32.totalorder %s294, %s310
      %p312 = scmp.eq.s32.totalorder %s40, 0
      %p313 = por %p311, %p312
      %s314 = ssub.s32 %s42, %s49
      %p315 = scmp.eq.s32.totalorder %s314, 0
      %s317 = sadd.s32 %s316, 1
      %s318 = scalar_select %p315, %s316, %s317
      %p321 = pneg %p315
      %p322 = scmp.eq.s32.totalorder %s34, 3
      %p323 = por %p321, %p322
      %p324 = scmp.ne.s32.totalorder %s316, %s319
      %p325 = scmp.eq.s32.totalorder %s34, 0
      %p326 = por %p324, %p325
      %p327 = scmp.ne.s32.totalorder %s316, %s319
      %p328 = scmp.eq.s32.totalorder %s39, 3
      %p329 = por %p327, %p328
      %p330 = scmp.ne.s32.totalorder %s319, %s320
      %p331 = scmp.eq.s32.totalorder %s39, 0
      %p332 = por %p330, %p331
      %p333 = scmp.ne.s32.totalorder %s319, %s320
      %p334 = scmp.eq.s32.totalorder %s40, 3
      %p335 = por %p333, %p334
      %p337 = scmp.ne.s32.totalorder %s320, %s336
      %p338 = scmp.eq.s32.totalorder %s40, 0
      %p339 = por %p337, %p338
      %s340 = ssub.s32 %s42, %s49
      %p341 = scmp.eq.s32.totalorder %s340, 0
      %s343 = sadd.s32 %s342, 1
      %s344 = scalar_select %p341, %s342, %s343
      %p347 = pneg %p341
      %p348 = scmp.eq.s32.totalorder %s34, 3
      %p349 = por %p347, %p348
      %p350 = scmp.ne.s32.totalorder %s342, %s345
      %p351 = scmp.eq.s32.totalorder %s34, 0
      %p352 = por %p350, %p351
      %p353 = scmp.ne.s32.totalorder %s342, %s345
      %p354 = scmp.eq.s32.totalorder %s39, 3
      %p355 = por %p353, %p354
      %p356 = scmp.ne.s32.totalorder %s345, %s346
      %p357 = scmp.eq.s32.totalorder %s39, 0
      %p358 = por %p356, %p357
      %p359 = scmp.ne.s32.totalorder %s345, %s346
      %p360 = scmp.eq.s32.totalorder %s40, 3
      %p361 = por %p359, %p360
      %p363 = scmp.ne.s32.totalorder %s346, %s362
      %p364 = scmp.eq.s32.totalorder %s40, 0
      %p365 = por %p363, %p364
      %s366 = ssub.s32 %s42, %s49
      %p367 = scmp.eq.s32.totalorder %s366, 0
      %s369 = sadd.s32 %s368, 1
      %s370 = scalar_select %p367, %s368, %s369
      %p373 = pneg %p367
      %p374 = scmp.eq.s32.totalorder %s34, 3
      %p375 = por %p373, %p374
      %p376 = scmp.ne.s32.totalorder %s368, %s371
      %p377 = scmp.eq.s32.totalorder %s34, 0
      %p378 = por %p376, %p377
      %p379 = scmp.ne.s32.totalorder %s368, %s371
      %p380 = scmp.eq.s32.totalorder %s39, 3
      %p381 = por %p379, %p380
      %p382 = scmp.ne.s32.totalorder %s371, %s372
      %p383 = scmp.eq.s32.totalorder %s39, 0
      %p384 = por %p382, %p383
      %p385 = scmp.ne.s32.totalorder %s371, %s372
      %p386 = scmp.eq.s32.totalorder %s40, 3
      %p387 = por %p385, %p386
      %p389 = scmp.ne.s32.totalorder %s372, %s388
      %p390 = scmp.eq.s32.totalorder %s40, 0
      %p391 = por %p389, %p390
      %s392 = ssub.s32 %s41, %s53
      %p393 = scmp.eq.s32.totalorder %s392, 0
      %s395 = sadd.s32 %s394, 1
      %s396 = scalar_select %p393, %s394, %s395
      %p399 = pneg %p393
      %p400 = scmp.eq.s32.totalorder %s34, 3
      %p401 = por %p399, %p400
      %p402 = scmp.ne.s32.totalorder %s394, %s397
      %p403 = scmp.eq.s32.totalorder %s34, 0
      %p404 = por %p402, %p403
      %p405 = scmp.ne.s32.totalorder %s394, %s397
      %p406 = scmp.eq.s32.totalorder %s39, 3
      %p407 = por %p405, %p406
      %p408 = scmp.ne.s32.totalorder %s397, %s398
      %p409 = scmp.eq.s32.totalorder %s39, 0
      %p410 = por %p408, %p409
      %p411 = scmp.ne.s32.totalorder %s397, %s398
      %p412 = scmp.eq.s32.totalorder %s40, 3
      %p413 = por %p411, %p412
      %p415 = scmp.ne.s32.totalorder %s398, %s414
      %p416 = scmp.eq.s32.totalorder %s40, 0
      %p417 = por %p415, %p416
      %p418 = scmp.le.s32.totalorder 1, %s34
      %p419 = scmp.lt.s32.totalorder %s34, 5
      %p420 = pnand %p418, %p419
      %p421 = pneg %p420
      // Predicated region
      $region9: #{tpu_custom_call.1} parent=5 // pred_check
        _
      $region10: #{tpu_custom_call.1} parent=5 // pred_check_branch
        %423 = sbr.rel (%p420) target = $region12
      $region11: #{tpu_custom_call.1} parent=5 // pred_region
        %s424 = ssub.s32 %s34, 1
      $region12: #{tpu_custom_call.1} parent=5 // pred_fallthru
        _
      %p425 = scmp.lt.s32.totalorder %s34, 4
      // Predicated region
      $region13: #{tpu_custom_call.1} parent=5 // pred_check
        %p426 = pneg %p425
      $region14: #{tpu_custom_call.1} parent=5 // pred_check_branch
        %428 = sbr.rel (%p426) target = $region16
      $region15: #{tpu_custom_call.1} parent=5 // pred_region
        // Predicated region
        $region17: #{tpu_custom_call.1} parent=15 // pred_check
          %p429 = pneg %p66
        $region18: #{tpu_custom_call.1} parent=15 // pred_check_branch
          %431 = sbr.rel (%p429) target = $region20
        $region19: #{tpu_custom_call.1} parent=15 // pred_region
          %s432 = sand.u32 %s56, 1
          %s433 = scalar_lea.sflag [#allocation8], %s432
          %s434 = sand.u32 %s56, 1
          %s435 = smul.addr %s434, 16
          %s436 = scalar_lea.vmem [#allocation7], %s435
          %s438 = ssub.s32 256, 256
          %439 = vsyncadd %s433, %s438
          %s440 = smul.addr %s41, 2
          %s441 = smul.addr %s440, 128
          %s442 = scalar_lea.hbm %s0, %s441
          %s443 = sshll.u32 %s436, 4
          %s444 = int_to_ptr.vmem [resolvable:$true] %s443
          %449 = dma.hbm_to_vmem [thread:$0]  %s442, 256, %s444, %s433, 128, 128, 8
        $region20: #{tpu_custom_call.1} parent=15 // pred_fallthru
          _
        // Predicated region
        $region21: #{tpu_custom_call.1} parent=15 // pred_check
          %p450 = pneg %p92
        $region22: #{tpu_custom_call.1} parent=15 // pred_check_branch
          %452 = sbr.rel (%p450) target = $region24
        $region23: #{tpu_custom_call.1} parent=15 // pred_region
          %s453 = sand.u32 %s34, 1
          %s454 = scalar_lea.sflag [#allocation11], %s453
          %s455 = sand.u32 %s82, 1
          %s456 = smul.addr %s455, 64
          %s457 = scalar_lea.vmem [#allocation10], %s456
          %s459 = ssub.s32 1024, 1024
          %460 = vsyncadd %s454, %s459
          %s461 = smul.addr %s42, 16
          %s462 = smul.addr %s461, 64
          %s463 = scalar_lea.hbm %s1, %s462
          %s464 = sshll.u32 %s457, 4
          %s465 = int_to_ptr.vmem [resolvable:$true] %s464
          %470 = dma.hbm_to_vmem [thread:$0]  %s463, 1024, %s465, %s454, 64, 64, 4
        $region24: #{tpu_custom_call.1} parent=15 // pred_fallthru
          _
        // Predicated region
        $region25: #{tpu_custom_call.1} parent=15 // pred_check
          %p471 = pneg %p118
        $region26: #{tpu_custom_call.1} parent=15 // pred_check_branch
          %473 = sbr.rel (%p471) target = $region28
        $region27: #{tpu_custom_call.1} parent=15 // pred_region
          %s474 = sand.u32 %s34, 1
          %s475 = scalar_lea.sflag [#allocation11], %s474
          %s476 = sand.u32 %s108, 1
          %s477 = smul.addr %s476, 64
          %s478 = scalar_lea.vmem [#allocation12], %s477
          %s480 = ssub.s32 1024, 1024
          %481 = vsyncadd %s475, %s480
          %s482 = smul.addr %s42, 16
          %s483 = smul.addr %s482, 64
          %s484 = scalar_lea.hbm %s2, %s483
          %s485 = sshll.u32 %s478, 4
          %s486 = int_to_ptr.vmem [resolvable:$true] %s485
          %491 = dma.hbm_to_vmem [thread:$0]  %s484, 1024, %s486, %s475, 64, 64, 4
        $region28: #{tpu_custom_call.1} parent=15 // pred_fallthru
          _
        // Predicated region
        $region29: #{tpu_custom_call.1} parent=15 // pred_check
          %p492 = pneg %p144
        $region30: #{tpu_custom_call.1} parent=15 // pred_check_branch
          %494 = sbr.rel (%p492) target = $region32
        $region31: #{tpu_custom_call.1} parent=15 // pred_region
          %s495 = sand.u32 %s34, 1
          %s496 = scalar_lea.sflag [#allocation14], %s495
          %s497 = sand.u32 %s134, 1
          %s498 = smul.addr %s497, 64
          %s499 = scalar_lea.vmem [#allocation13], %s498
          %s501 = ssub.s32 1024, 1024
          %502 = vsyncadd %s496, %s501
          %s503 = smul.addr %s42, 16
          %s504 = smul.addr %s503, 64
          %s505 = scalar_lea.hbm %s3, %s504
          %s506 = sshll.u32 %s499, 4
          %s507 = int_to_ptr.vmem [resolvable:$true] %s506
          %512 = dma.hbm_to_vmem [thread:$0]  %s505, 1024, %s507, %s496, 64, 64, 4
        $region32: #{tpu_custom_call.1} parent=15 // pred_fallthru
          _
        // Predicated region
        $region33: #{tpu_custom_call.1} parent=15 // pred_check
          %p513 = pneg %p170
        $region34: #{tpu_custom_call.1} parent=15 // pred_check_branch
          %515 = sbr.rel (%p513) target = $region36
        $region35: #{tpu_custom_call.1} parent=15 // pred_region
          %s516 = sand.u32 %s34, 1
          %s517 = scalar_lea.sflag [#allocation14], %s516
          %s518 = sand.u32 %s160, 1
          %s519 = smul.addr %s518, 64
          %s520 = scalar_lea.vmem [#allocation15], %s519
          %s522 = ssub.s32 1024, 1024
          %523 = vsyncadd %s517, %s522
          %s524 = smul.addr %s42, 16
          %s525 = smul.addr %s524, 64
          %s526 = scalar_lea.hbm %s4, %s525
          %s527 = sshll.u32 %s520, 4
          %s528 = int_to_ptr.vmem [resolvable:$true] %s527
          %533 = dma.hbm_to_vmem [thread:$0]  %s526, 1024, %s528, %s517, 64, 64, 4
        $region36: #{tpu_custom_call.1} parent=15 // pred_fallthru
          _
        // Predicated region
        $region37: #{tpu_custom_call.1} parent=15 // pred_check
          %p534 = pneg %p196
        $region38: #{tpu_custom_call.1} parent=15 // pred_check_branch
          %536 = sbr.rel (%p534) target = $region40
        $region39: #{tpu_custom_call.1} parent=15 // pred_region
          %s537 = sand.u32 %s34, 1
          %s538 = scalar_lea.sflag [#allocation17], %s537
          %s539 = sand.u32 %s186, 1
          %s540 = smul.addr %s539, 256
          %s541 = scalar_lea.vmem [#allocation16], %s540
          %s543 = ssub.s32 4096, 4096
          %544 = vsyncadd %s538, %s543
          %s545 = smul.addr %s42, 64
          %s546 = smul.addr %s545, 64
          %s547 = scalar_lea.hbm %s5, %s546
          %s548 = sshll.u32 %s541, 4
          %s549 = int_to_ptr.vmem [resolvable:$true] %s548
          %554 = dma.hbm_to_vmem [thread:$0]  %s547, 4096, %s549, %s538, 256, 256, 16
        $region40: #{tpu_custom_call.1} parent=15 // pred_fallthru
          _
        // Predicated region
        $region41: #{tpu_custom_call.1} parent=15 // pred_check
          %p555 = pneg %p222
        $region42: #{tpu_custom_call.1} parent=15 // pred_check_branch
          %557 = sbr.rel (%p555) target = $region44
        $region43: #{tpu_custom_call.1} parent=15 // pred_region
          %p558 = scmp.lt.s32.totalorder %s42, 1
          %s559 = scalar_select %p558, %s42, 1
          %s560 = smul.addr %s559, 4
          %s561 = scalar_lea.vmem %s6, %s560
        $region44: #{tpu_custom_call.1} parent=15 // pred_fallthru
          _
        // Predicated region
        $region45: #{tpu_custom_call.1} parent=15 // pred_check
          %p562 = pneg %p248
        $region46: #{tpu_custom_call.1} parent=15 // pred_check_branch
          %564 = sbr.rel (%p562) target = $region48
        $region47: #{tpu_custom_call.1} parent=15 // pred_region
          %s565 = sand.u32 %s34, 1
          %s566 = scalar_lea.sflag [#allocation17], %s565
          %s567 = sand.u32 %s238, 1
          %s568 = smul.addr %s567, 256
          %s569 = scalar_lea.vmem [#allocation18], %s568
          %s571 = ssub.s32 4096, 4096
          %572 = vsyncadd %s566, %s571
          %s573 = smul.addr %s42, 64
          %s574 = smul.addr %s573, 64
          %s575 = scalar_lea.hbm %s7, %s574
          %s576 = sshll.u32 %s569, 4
          %s577 = int_to_ptr.vmem [resolvable:$true] %s576
          %582 = dma.hbm_to_vmem [thread:$0]  %s575, 4096, %s577, %s566, 64, 64, 4
        $region48: #{tpu_custom_call.1} parent=15 // pred_fallthru
          _
        // Predicated region
        $region49: #{tpu_custom_call.1} parent=15 // pred_check
          %p583 = pneg %p274
        $region50: #{tpu_custom_call.1} parent=15 // pred_check_branch
          %585 = sbr.rel (%p583) target = $region52
        $region51: #{tpu_custom_call.1} parent=15 // pred_region
          %p586 = scmp.lt.s32.totalorder %s42, 1
          %s587 = scalar_select %p586, %s42, 1
          %s588 = scalar_lea.vmem %s8, %s587
        $region52: #{tpu_custom_call.1} parent=15 // pred_fallthru
          _
        // Predicated region
        $region53: #{tpu_custom_call.1} parent=15 // pred_check
          %p589 = pneg %p300
        $region54: #{tpu_custom_call.1} parent=15 // pred_check_branch
          %591 = sbr.rel (%p589) target = $region56
        $region55: #{tpu_custom_call.1} parent=15 // pred_region
          %p592 = scmp.lt.s32.totalorder %s42, 1
          %s593 = scalar_select %p592, %s42, 1
          %s594 = scalar_lea.vmem %s9, %s593
        $region56: #{tpu_custom_call.1} parent=15 // pred_fallthru
          _
        // Predicated region
        $region57: #{tpu_custom_call.1} parent=15 // pred_check
          %p595 = pneg %p326
        $region58: #{tpu_custom_call.1} parent=15 // pred_check_branch
          %597 = sbr.rel (%p595) target = $region60
        $region59: #{tpu_custom_call.1} parent=15 // pred_region
          %p598 = scmp.lt.s32.totalorder %s42, 1
          %s599 = scalar_select %p598, %s42, 1
          %s600 = scalar_lea.vmem %s10, %s599
        $region60: #{tpu_custom_call.1} parent=15 // pred_fallthru
          _
        // Predicated region
        $region61: #{tpu_custom_call.1} parent=15 // pred_check
          %p601 = pneg %p352
        $region62: #{tpu_custom_call.1} parent=15 // pred_check_branch
          %603 = sbr.rel (%p601) target = $region64
        $region63: #{tpu_custom_call.1} parent=15 // pred_region
          %p604 = scmp.lt.s32.totalorder %s42, 1
          %s605 = scalar_select %p604, %s42, 1
          %s606 = scalar_lea.vmem %s11, %s605
        $region64: #{tpu_custom_call.1} parent=15 // pred_fallthru
          _
        // Predicated region
        $region65: #{tpu_custom_call.1} parent=15 // pred_check
          %p607 = pneg %p378
        $region66: #{tpu_custom_call.1} parent=15 // pred_check_branch
          %609 = sbr.rel (%p607) target = $region68
        $region67: #{tpu_custom_call.1} parent=15 // pred_region
          %p610 = scmp.lt.s32.totalorder %s42, 1
          %s611 = scalar_select %p610, %s42, 1
          %s612 = scalar_lea.vmem %s12, %s611
        $region68: #{tpu_custom_call.1} parent=15 // pred_fallthru
          _
      $region16: #{tpu_custom_call.1} parent=5 // pred_fallthru
        _
      %p613 = scmp.le.s32.totalorder 1, %s34
      %p614 = scmp.lt.s32.totalorder %s34, 5
      %p615 = pnand %p613, %p614
      %p616 = pneg %p615
      // Predicated region
      $region69: #{tpu_custom_call.1} parent=5 // pred_check
        _
      $region70: #{tpu_custom_call.1} parent=5 // pred_check_branch
        %618 = sbr.rel (%p615) target = $region72
      $region71: #{tpu_custom_call.1} parent=5 // pred_region
        %s619 = ssub.s32 %s34, 1
        %s620 = sand.u32 %s59, 1
        %s621 = scalar_lea.sflag [#allocation8], %s620
        %s622 = sand.u32 %s59, 1
        %s623 = smul.addr %s622, 16
        %s624 = scalar_lea.vmem [#allocation7], %s623
        // Predicated region
        $region73: #{tpu_custom_call.1} parent=71 // pred_check
          %p625 = pneg %p72
        $region74: #{tpu_custom_call.1} parent=71 // pred_check_branch
          %627 = sbr.rel (%p625) target = $region76
        $region75: #{tpu_custom_call.1} parent=71 // pred_region
          %628 = dma.done %s621, 256
        $region76: #{tpu_custom_call.1} parent=71 // pred_fallthru
          _
        %s629 = sand.u32 %s39, 1
        %s630 = scalar_lea.sflag [#allocation11], %s629
        %s631 = sand.u32 %s85, 1
        %s632 = smul.addr %s631, 64
        %s633 = scalar_lea.vmem [#allocation10], %s632
        // Predicated region
        $region77: #{tpu_custom_call.1} parent=71 // pred_check
          %p634 = pneg %p98
        $region78: #{tpu_custom_call.1} parent=71 // pred_check_branch
          %636 = sbr.rel (%p634) target = $region80
        $region79: #{tpu_custom_call.1} parent=71 // pred_region
          %637 = dma.done %s630, 1024
        $region80: #{tpu_custom_call.1} parent=71 // pred_fallthru
          _
        %s638 = sand.u32 %s39, 1
        %s639 = scalar_lea.sflag [#allocation11], %s638
        %s640 = sand.u32 %s111, 1
        %s641 = smul.addr %s640, 64
        %s642 = scalar_lea.vmem [#allocation12], %s641
        // Predicated region
        $region81: #{tpu_custom_call.1} parent=71 // pred_check
          %p643 = pneg %p124
        $region82: #{tpu_custom_call.1} parent=71 // pred_check_branch
          %645 = sbr.rel (%p643) target = $region84
        $region83: #{tpu_custom_call.1} parent=71 // pred_region
          %646 = dma.done %s639, 1024
        $region84: #{tpu_custom_call.1} parent=71 // pred_fallthru
          _
        %s647 = sand.u32 %s39, 1
        %s648 = scalar_lea.sflag [#allocation14], %s647
        %s649 = sand.u32 %s137, 1
        %s650 = smul.addr %s649, 64
        %s651 = scalar_lea.vmem [#allocation13], %s650
        // Predicated region
        $region85: #{tpu_custom_call.1} parent=71 // pred_check
          %p652 = pneg %p150
        $region86: #{tpu_custom_call.1} parent=71 // pred_check_branch
          %654 = sbr.rel (%p652) target = $region88
        $region87: #{tpu_custom_call.1} parent=71 // pred_region
          %655 = dma.done %s648, 1024
        $region88: #{tpu_custom_call.1} parent=71 // pred_fallthru
          _
        %s656 = sand.u32 %s39, 1
        %s657 = scalar_lea.sflag [#allocation14], %s656
        %s658 = sand.u32 %s163, 1
        %s659 = smul.addr %s658, 64
        %s660 = scalar_lea.vmem [#allocation15], %s659
        // Predicated region
        $region89: #{tpu_custom_call.1} parent=71 // pred_check
          %p661 = pneg %p176
        $region90: #{tpu_custom_call.1} parent=71 // pred_check_branch
          %663 = sbr.rel (%p661) target = $region92
        $region91: #{tpu_custom_call.1} parent=71 // pred_region
          %664 = dma.done %s657, 1024
        $region92: #{tpu_custom_call.1} parent=71 // pred_fallthru
          _
        %s665 = sand.u32 %s39, 1
        %s666 = scalar_lea.sflag [#allocation17], %s665
        %s667 = sand.u32 %s189, 1
        %s668 = smul.addr %s667, 256
        %s669 = scalar_lea.vmem [#allocation16], %s668
        // Predicated region
        $region93: #{tpu_custom_call.1} parent=71 // pred_check
          %p670 = pneg %p202
        $region94: #{tpu_custom_call.1} parent=71 // pred_check_branch
          %672 = sbr.rel (%p670) target = $region96
        $region95: #{tpu_custom_call.1} parent=71 // pred_region
          %673 = dma.done %s666, 4096
        $region96: #{tpu_custom_call.1} parent=71 // pred_fallthru
          _
        %s674 = sand.u32 %s39, 1
        %s675 = scalar_lea.sflag [#allocation17], %s674
        %s676 = sand.u32 %s241, 1
        %s677 = smul.addr %s676, 256
        %s678 = scalar_lea.vmem [#allocation18], %s677
        // Predicated region
        $region97: #{tpu_custom_call.1} parent=71 // pred_check
          %p679 = pneg %p254
        $region98: #{tpu_custom_call.1} parent=71 // pred_check_branch
          %681 = sbr.rel (%p679) target = $region100
        $region99: #{tpu_custom_call.1} parent=71 // pred_region
          %682 = dma.done %s675, 4096
        $region100: #{tpu_custom_call.1} parent=71 // pred_fallthru
          _
        %s683 = sand.u32 %s59, 1
        %s684 = scalar_lea.sflag [#allocation8], %s683
        %s685 = sand.u32 %s59, 1
        %s686 = smul.addr %s685, 16
        %s687 = scalar_lea.vmem [#allocation7], %s686
        %p688 = pneg %p72
        %p689 = pneg %p69
        %s690 = sand.u32 %s39, 1
        %s691 = scalar_lea.sflag [#allocation11], %s690
        %s692 = sand.u32 %s85, 1
        %s693 = smul.addr %s692, 64
        %s694 = scalar_lea.vmem [#allocation10], %s693
        %p695 = pneg %p98
        %p696 = pneg %p95
        %s697 = sand.u32 %s39, 1
        %s698 = scalar_lea.sflag [#allocation11], %s697
        %s699 = sand.u32 %s111, 1
        %s700 = smul.addr %s699, 64
        %s701 = scalar_lea.vmem [#allocation12], %s700
        %p702 = pneg %p124
        %p703 = pneg %p121
        %s704 = sand.u32 %s39, 1
        %s705 = scalar_lea.sflag [#allocation14], %s704
        %s706 = sand.u32 %s137, 1
        %s707 = smul.addr %s706, 64
        %s708 = scalar_lea.vmem [#allocation13], %s707
        %p709 = pneg %p150
        %p710 = pneg %p147
        %s711 = sand.u32 %s39, 1
        %s712 = scalar_lea.sflag [#allocation14], %s711
        %s713 = sand.u32 %s163, 1
        %s714 = smul.addr %s713, 64
        %s715 = scalar_lea.vmem [#allocation15], %s714
        %p716 = pneg %p176
        %p717 = pneg %p173
        %s718 = sand.u32 %s39, 1
        %s719 = scalar_lea.sflag [#allocation17], %s718
        %s720 = sand.u32 %s189, 1
        %s721 = smul.addr %s720, 256
        %s722 = scalar_lea.vmem [#allocation16], %s721
        %p723 = pneg %p202
        %p724 = pneg %p199
        %p725 = scmp.lt.s32.totalorder %s44, 1
        %s726 = scalar_select %p725, %s44, 1
        %s727 = smul.addr %s726, 4
        %s728 = scalar_lea.vmem %s6, %s727
        %p729 = pneg %p228
        %p730 = pneg %p225
        %s731 = sand.u32 %s39, 1
        %s732 = scalar_lea.sflag [#allocation17], %s731
        %s733 = sand.u32 %s241, 1
        %s734 = smul.addr %s733, 256
        %s735 = scalar_lea.vmem [#allocation18], %s734
        %p736 = pneg %p254
        %p737 = pneg %p251
        %p738 = scmp.lt.s32.totalorder %s44, 1
        %s739 = scalar_select %p738, %s44, 1
        %s740 = scalar_lea.vmem %s8, %s739
        %p741 = pneg %p280
        %p742 = pneg %p277
        %p743 = scmp.lt.s32.totalorder %s44, 1
        %s744 = scalar_select %p743, %s44, 1
        %s745 = scalar_lea.vmem %s9, %s744
        %p746 = pneg %p306
        %p747 = pneg %p303
        %p748 = scmp.lt.s32.totalorder %s44, 1
        %s749 = scalar_select %p748, %s44, 1
        %s750 = scalar_lea.vmem %s10, %s749
        %p751 = pneg %p332
        %p752 = pneg %p329
        %p753 = scmp.lt.s32.totalorder %s44, 1
        %s754 = scalar_select %p753, %s44, 1
        %s755 = scalar_lea.vmem %s11, %s754
        %p756 = pneg %p358
        %p757 = pneg %p355
        %p758 = scmp.lt.s32.totalorder %s44, 1
        %s759 = scalar_select %p758, %s44, 1
        %s760 = scalar_lea.vmem %s12, %s759
        %p761 = pneg %p384
        %p762 = pneg %p381
        %p763 = pneg %p410
        %p764 = pneg %p407
        %s765 = sand.u32 %s397, 1
        %s766 = scalar_lea.sflag [#allocation9], %s765
        %s767 = sand.u32 %s397, 1
        %s768 = smul.addr %s767, 16
        %s769 = scalar_lea.vmem [#allocation19], %s768
        %p770 = scmp.lt.s32.totalorder %s44, 1
        %s771 = scalar_select %p770, %s44, 1
        %s772 = smul.addr %s771, 4
        %s773 = scalar_lea.vmem %s6, %s772
        %p774 = scmp.lt.s32.totalorder %s44, 1
        %s775 = scalar_select %p774, %s44, 1
        %s776 = scalar_lea.vmem %s8, %s775
        %p777 = scmp.lt.s32.totalorder %s44, 1
        %s778 = scalar_select %p777, %s44, 1
        %s779 = scalar_lea.vmem %s9, %s778
        %p780 = scmp.lt.s32.totalorder %s44, 1
        %s781 = scalar_select %p780, %s44, 1
        %s782 = scalar_lea.vmem %s10, %s781
        %p783 = scmp.lt.s32.totalorder %s44, 1
        %s784 = scalar_select %p783, %s44, 1
        %s785 = scalar_lea.vmem %s11, %s784
        %p786 = scmp.lt.s32.totalorder %s44, 1
        %s787 = scalar_select %p786, %s44, 1
        %s788 = scalar_lea.vmem %s12, %s787
        %p790 = scmp.eq.s32.totalorder %s44, 0
        // Predicated region
        $region101: #{tpu_custom_call.1} parent=71 // pred_check
          %p791 = pneg %p790
        $region102: #{tpu_custom_call.1} parent=71 // pred_check_branch
          %793 = sbr.rel (%p791) target = $region104
        $region103: #{tpu_custom_call.1} parent=71 // pred_region
          %v794 = vld [vmem:[%s624] sm:$0xff]
          %v795 = vld [vmem:[%s624 + $0x8] sm:$0xff]
          %796 = vst [vmem:[#allocation6] sm:$0xff] %v794
          %797 = vst [vmem:[#allocation6 + $0x8] sm:$0xff] %v795
        $region104: #{tpu_custom_call.1} parent=71 // pred_fallthru
          _
        %v798 = vld [vmem:[#allocation6] sm:$0xff]
        %v799 = vld [vmem:[#allocation6 + $0x8] sm:$0xff]
        %v800 = vpack.c.bf16 %v799, %v798
        %v801 = vld [vmem:[%s633] sm:$0xf]
        %v802 = vld [vmem:[%s633 + $0x4] sm:$0xf]
        %v803 = vld [vmem:[%s633 + $0x8] sm:$0xf]
        %v804 = vld [vmem:[%s633 + $0xc] sm:$0xf]
        %v805 = vld [vmem:[%s633 + $0x10] sm:$0xf]
        %v806 = vld [vmem:[%s633 + $0x14] sm:$0xf]
        %v807 = vld [vmem:[%s633 + $0x18] sm:$0xf]
        %v808 = vld [vmem:[%s633 + $0x1c] sm:$0xf]
        %v809 = vld [vmem:[%s633 + $0x20] sm:$0xf]
        %v810 = vld [vmem:[%s633 + $0x24] sm:$0xf]
        %v811 = vld [vmem:[%s633 + $0x28] sm:$0xf]
        %v812 = vld [vmem:[%s633 + $0x2c] sm:$0xf]
        %v813 = vld [vmem:[%s633 + $0x30] sm:$0xf]
        %v814 = vld [vmem:[%s633 + $0x34] sm:$0xf]
        %v815 = vld [vmem:[%s633 + $0x38] sm:$0xf]
        %v816 = vld [vmem:[%s633 + $0x3c] sm:$0xf]
        %v833 = vunpack.c.l.b16 %v801
        %v834 = vunpack.c.l.b16 %v802
        %v835 = vunpack.c.l.b16 %v803
        %v836 = vunpack.c.l.b16 %v804
        %v837 = vunpack.c.l.b16 %v805
        %v838 = vunpack.c.l.b16 %v806
        %v839 = vunpack.c.l.b16 %v807
        %v840 = vunpack.c.l.b16 %v808
        %v841 = vunpack.c.l.b16 %v809
        %v842 = vunpack.c.l.b16 %v810
        %v843 = vunpack.c.l.b16 %v811
        %v844 = vunpack.c.l.b16 %v812
        %v845 = vunpack.c.l.b16 %v813
        %v846 = vunpack.c.l.b16 %v814
        %v847 = vunpack.c.l.b16 %v815
        %v848 = vunpack.c.l.b16 %v816
        %v849 = vpack.c.b16 %v834, %v833
        %v850 = vpack.c.b16 %v836, %v835
        %v851 = vpack.c.b16 %v838, %v837
        %v852 = vpack.c.b16 %v840, %v839
        %v853 = vpack.c.b16 %v842, %v841
        %v854 = vpack.c.b16 %v844, %v843
        %v855 = vpack.c.b16 %v846, %v845
        %v856 = vpack.c.b16 %v848, %v847
        %865 = vmatprep.subr.bf16.mxu0 0
        %866 = vmatpush1.bf16.msra.mxu0 %v849
        %867 = vmatprep.subr.bf16.mxu0 0
        %868 = vmatpush1.bf16.msra.mxu0 %v850
        %869 = vmatprep.subr.bf16.mxu0 0
        %870 = vmatpush1.bf16.msra.mxu0 %v851
        %871 = vmatprep.subr.bf16.mxu0 0
        %872 = vmatpush1.bf16.msra.mxu0 %v852
        %873 = vmatprep.subr.bf16.mxu0 0
        %874 = vmatpush1.bf16.msra.mxu0 %v853
        %875 = vmatprep.subr.bf16.mxu0 0
        %876 = vmatpush1.bf16.msra.mxu0 %v854
        %877 = vmatprep.subr.bf16.mxu0 0
        %878 = vmatpush1.bf16.msra.mxu0 %v855
        %879 = vmatprep.subr.bf16.mxu0 0
        %880 = vmatpush1.bf16.msra.mxu0 %v856
        %881 = vmatprep.subr.bf16.mxu0 0
        %882 = vmatpush1.bf16.msra.mxu0 0
        %883 = vmatprep.subr.bf16.mxu0 0
        %884 = vmatpush1.bf16.msra.mxu0 0
        %885 = vmatprep.subr.bf16.mxu0 0
        %886 = vmatpush1.bf16.msra.mxu0 0
        %887 = vmatprep.subr.bf16.mxu0 0
        %888 = vmatpush1.bf16.msra.mxu0 0
        %889 = vmatprep.subr.bf16.mxu0 0
        %890 = vmatpush1.bf16.msra.mxu0 0
        %891 = vmatprep.subr.bf16.mxu0 0
        %892 = vmatpush1.bf16.msra.mxu0 0
        %893 = vmatprep.subr.bf16.mxu0 0
        %894 = vmatpush1.bf16.msra.mxu0 0
        %895 = vmatprep.subr.bf16.mxu0 0
        %896 = vmatpush1.bf16.msra.mxu0 0
        %897 = vmatprep.mubr.bf16.mxu0 0
        %898 = vmatmul.mubr.bf16.gmra.mrb[0].mxu0 %v800
        %v899 = vpop.f32.mrb[0].mxu0
        %v900 = vadd.f32 0.0, %v899
        %v901 = vpop.f32.mrb[0].mxu0
        %v902 = vpop.f32.mrb[0].mxu0
        %v903 = vadd.f32 0.0, %v902
        %v904 = vpop.f32.mrb[0].mxu0
        %905 = vdwg.mxu0
        %v906 = vld [vmem:[%s642] sm:$0xf]
        %v907 = vld [vmem:[%s642 + $0x4] sm:$0xf]
        %v908 = vld [vmem:[%s642 + $0x8] sm:$0xf]
        %v909 = vld [vmem:[%s642 + $0xc] sm:$0xf]
        %v910 = vld [vmem:[%s642 + $0x10] sm:$0xf]
        %v911 = vld [vmem:[%s642 + $0x14] sm:$0xf]
        %v912 = vld [vmem:[%s642 + $0x18] sm:$0xf]
        %v913 = vld [vmem:[%s642 + $0x1c] sm:$0xf]
        %v914 = vld [vmem:[%s642 + $0x20] sm:$0xf]
        %v915 = vld [vmem:[%s642 + $0x24] sm:$0xf]
        %v916 = vld [vmem:[%s642 + $0x28] sm:$0xf]
        %v917 = vld [vmem:[%s642 + $0x2c] sm:$0xf]
        %v918 = vld [vmem:[%s642 + $0x30] sm:$0xf]
        %v919 = vld [vmem:[%s642 + $0x34] sm:$0xf]
        %v920 = vld [vmem:[%s642 + $0x38] sm:$0xf]
        %v921 = vld [vmem:[%s642 + $0x3c] sm:$0xf]
        %v938 = vunpack.c.l.b16 %v906
        %v939 = vunpack.c.l.b16 %v907
        %v940 = vunpack.c.l.b16 %v908
        %v941 = vunpack.c.l.b16 %v909
        %v942 = vunpack.c.l.b16 %v910
        %v943 = vunpack.c.l.b16 %v911
        %v944 = vunpack.c.l.b16 %v912
        %v945 = vunpack.c.l.b16 %v913
        %v946 = vunpack.c.l.b16 %v914
        %v947 = vunpack.c.l.b16 %v915
        %v948 = vunpack.c.l.b16 %v916
        %v949 = vunpack.c.l.b16 %v917
        %v950 = vunpack.c.l.b16 %v918
        %v951 = vunpack.c.l.b16 %v919
        %v952 = vunpack.c.l.b16 %v920
        %v953 = vunpack.c.l.b16 %v921
        %v954 = vpack.c.b16 %v939, %v938
        %v955 = vpack.c.b16 %v941, %v940
        %v956 = vpack.c.b16 %v943, %v942
        %v957 = vpack.c.b16 %v945, %v944
        %v958 = vpack.c.b16 %v947, %v946
        %v959 = vpack.c.b16 %v949, %v948
        %v960 = vpack.c.b16 %v951, %v950
        %v961 = vpack.c.b16 %v953, %v952
        %970 = vmatprep.subr.bf16.mxu0 0
        %971 = vmatpush1.bf16.msra.mxu0 %v954
        %972 = vmatprep.subr.bf16.mxu0 0
        %973 = vmatpush1.bf16.msra.mxu0 %v955
        %974 = vmatprep.subr.bf16.mxu0 0
        %975 = vmatpush1.bf16.msra.mxu0 %v956
        %976 = vmatprep.subr.bf16.mxu0 0
        %977 = vmatpush1.bf16.msra.mxu0 %v957
        %978 = vmatprep.subr.bf16.mxu0 0
        %979 = vmatpush1.bf16.msra.mxu0 %v958
        %980 = vmatprep.subr.bf16.mxu0 0
        %981 = vmatpush1.bf16.msra.mxu0 %v959
        %982 = vmatprep.subr.bf16.mxu0 0
        %983 = vmatpush1.bf16.msra.mxu0 %v960
        %984 = vmatprep.subr.bf16.mxu0 0
        %985 = vmatpush1.bf16.msra.mxu0 %v961
        %986 = vmatprep.subr.bf16.mxu0 0
        %987 = vmatpush1.bf16.msra.mxu0 0
        %988 = vmatprep.subr.bf16.mxu0 0
        %989 = vmatpush1.bf16.msra.mxu0 0
        %990 = vmatprep.subr.bf16.mxu0 0
        %991 = vmatpush1.bf16.msra.mxu0 0
        %992 = vmatprep.subr.bf16.mxu0 0
        %993 = vmatpush1.bf16.msra.mxu0 0
        %994 = vmatprep.subr.bf16.mxu0 0
        %995 = vmatpush1.bf16.msra.mxu0 0
        %996 = vmatprep.subr.bf16.mxu0 0
        %997 = vmatpush1.bf16.msra.mxu0 0
        %998 = vmatprep.subr.bf16.mxu0 0
        %999 = vmatpush1.bf16.msra.mxu0 0
        %1000 = vmatprep.subr.bf16.mxu0 0
        %1001 = vmatpush1.bf16.msra.mxu0 0
        %1002 = vmatprep.mubr.bf16.mxu0 0
        %1003 = vmatmul.mubr.bf16.gmra.mrb[0].mxu0 %v800
        %v1004 = vpop.f32.mrb[0].mxu0
        %v1005 = vadd.f32 0.0, %v1004
        %v1006 = vpop.f32.mrb[0].mxu0
        %v1007 = vpop.f32.mrb[0].mxu0
        %v1008 = vadd.f32 0.0, %v1007
        %v1009 = vpop.f32.mrb[0].mxu0
        %1010 = vdwg.mxu0
        %v1011 = vld [vmem:[%s651] sm:$0xf]
        %v1012 = vld [vmem:[%s651 + $0x4] sm:$0xf]
        %v1013 = vld [vmem:[%s651 + $0x8] sm:$0xf]
        %v1014 = vld [vmem:[%s651 + $0xc] sm:$0xf]
        %v1015 = vld [vmem:[%s651 + $0x10] sm:$0xf]
        %v1016 = vld [vmem:[%s651 + $0x14] sm:$0xf]
        %v1017 = vld [vmem:[%s651 + $0x18] sm:$0xf]
        %v1018 = vld [vmem:[%s651 + $0x1c] sm:$0xf]
        %v1019 = vld [vmem:[%s651 + $0x20] sm:$0xf]
        %v1020 = vld [vmem:[%s651 + $0x24] sm:$0xf]
        %v1021 = vld [vmem:[%s651 + $0x28] sm:$0xf]
        %v1022 = vld [vmem:[%s651 + $0x2c] sm:$0xf]
        %v1023 = vld [vmem:[%s651 + $0x30] sm:$0xf]
        %v1024 = vld [vmem:[%s651 + $0x34] sm:$0xf]
        %v1025 = vld [vmem:[%s651 + $0x38] sm:$0xf]
        %v1026 = vld [vmem:[%s651 + $0x3c] sm:$0xf]
        %v1043 = vunpack.c.l.b16 %v1011
        %v1044 = vunpack.c.l.b16 %v1012
        %v1045 = vunpack.c.l.b16 %v1013
        %v1046 = vunpack.c.l.b16 %v1014
        %v1047 = vunpack.c.l.b16 %v1015
        %v1048 = vunpack.c.l.b16 %v1016
        %v1049 = vunpack.c.l.b16 %v1017
        %v1050 = vunpack.c.l.b16 %v1018
        %v1051 = vunpack.c.l.b16 %v1019
        %v1052 = vunpack.c.l.b16 %v1020
        %v1053 = vunpack.c.l.b16 %v1021
        %v1054 = vunpack.c.l.b16 %v1022
        %v1055 = vunpack.c.l.b16 %v1023
        %v1056 = vunpack.c.l.b16 %v1024
        %v1057 = vunpack.c.l.b16 %v1025
        %v1058 = vunpack.c.l.b16 %v1026
        %v1059 = vpack.c.b16 %v1044, %v1043
        %v1060 = vpack.c.b16 %v1046, %v1045
        %v1061 = vpack.c.b16 %v1048, %v1047
        %v1062 = vpack.c.b16 %v1050, %v1049
        %v1063 = vpack.c.b16 %v1052, %v1051
        %v1064 = vpack.c.b16 %v1054, %v1053
        %v1065 = vpack.c.b16 %v1056, %v1055
        %v1066 = vpack.c.b16 %v1058, %v1057
        %1075 = vmatprep.subr.bf16.mxu0 0
        %1076 = vmatpush1.bf16.msra.mxu0 %v1059
        %1077 = vmatprep.subr.bf16.mxu0 0
        %1078 = vmatpush1.bf16.msra.mxu0 %v1060
        %1079 = vmatprep.subr.bf16.mxu0 0
        %1080 = vmatpush1.bf16.msra.mxu0 %v1061
        %1081 = vmatprep.subr.bf16.mxu0 0
        %1082 = vmatpush1.bf16.msra.mxu0 %v1062
        %1083 = vmatprep.subr.bf16.mxu0 0
        %1084 = vmatpush1.bf16.msra.mxu0 %v1063
        %1085 = vmatprep.subr.bf16.mxu0 0
        %1086 = vmatpush1.bf16.msra.mxu0 %v1064
        %1087 = vmatprep.subr.bf16.mxu0 0
        %1088 = vmatpush1.bf16.msra.mxu0 %v1065
        %1089 = vmatprep.subr.bf16.mxu0 0
        %1090 = vmatpush1.bf16.msra.mxu0 %v1066
        %1091 = vmatprep.subr.bf16.mxu0 0
        %1092 = vmatpush1.bf16.msra.mxu0 0
        %1093 = vmatprep.subr.bf16.mxu0 0
        %1094 = vmatpush1.bf16.msra.mxu0 0
        %1095 = vmatprep.subr.bf16.mxu0 0
        %1096 = vmatpush1.bf16.msra.mxu0 0
        %1097 = vmatprep.subr.bf16.mxu0 0
        %1098 = vmatpush1.bf16.msra.mxu0 0
        %1099 = vmatprep.subr.bf16.mxu0 0
        %1100 = vmatpush1.bf16.msra.mxu0 0
        %1101 = vmatprep.subr.bf16.mxu0 0
        %1102 = vmatpush1.bf16.msra.mxu0 0
        %1103 = vmatprep.subr.bf16.mxu0 0
        %1104 = vmatpush1.bf16.msra.mxu0 0
        %1105 = vmatprep.subr.bf16.mxu0 0
        %1106 = vmatpush1.bf16.msra.mxu0 0
        %1107 = vmatprep.mubr.bf16.mxu0 0
        %1108 = vmatmul.mubr.bf16.gmra.mrb[0].mxu0 %v800
        %v1109 = vpop.f32.mrb[0].mxu0
        %v1110 = vadd.f32 0.0, %v1109
        %v1111 = vpop.f32.mrb[0].mxu0
        %v1112 = vpop.f32.mrb[0].mxu0
        %v1113 = vadd.f32 0.0, %v1112
        %v1114 = vpop.f32.mrb[0].mxu0
        %1115 = vdwg.mxu0
        %v1116 = vpack.c.bf16 %v903, %v900
        %vm1117 = vcmask 261120
        %1118 = vst.msk [vmem:[#allocation2] sm:$0xff] %vm1117, %v1116
        %v1119 = vpack.c.bf16 %v1008, %v1005
        %1120 = vst.msk [vmem:[#allocation3] sm:$0xff] %vm1117, %v1119
        %v1121 = vpack.c.bf16 %v1113, %v1110
        %1122 = vst.msk [vmem:[#allocation4] sm:$0xff] %vm1117, %v1121
        %1124 = vrot.lane.b32.xlu0 %v1116, 96
        %v1125 = vpop.permute.xlu0 %1124
        %s1127 = scalar_lea.vmem [#allocation2], 8
        %1128 = vst.msk [vmem:[%s1127] sm:$0xff] %vm1117, %v1125
        %1130 = vrot.lane.b32.xlu0 %v1119, 96
        %v1131 = vpop.permute.xlu0 %1130
        %s1133 = scalar_lea.vmem [#allocation3], 8
        %1134 = vst.msk [vmem:[%s1133] sm:$0xff] %vm1117, %v1131
        %1136 = vrot.lane.b32.xlu0 %v1121, 96
        %v1137 = vpop.permute.xlu0 %1136
        %s1139 = scalar_lea.vmem [#allocation4], 8
        %1140 = vst.msk [vmem:[%s1139] sm:$0xff] %vm1117, %v1137
        %1141 = vrot.lane.b32.xlu0 %v1116, 64
        %v1142 = vpop.permute.xlu0 %1141
        %s1144 = scalar_lea.vmem [#allocation2], 16
        %1145 = vst.msk [vmem:[%s1144] sm:$0xff] %vm1117, %v1142
        %1146 = vrot.lane.b32.xlu0 %v1119, 64
        %v1147 = vpop.permute.xlu0 %1146
        %s1149 = scalar_lea.vmem [#allocation3], 16
        %1150 = vst.msk [vmem:[%s1149] sm:$0xff] %vm1117, %v1147
        %1151 = vrot.lane.b32.xlu0 %v1121, 64
        %v1152 = vpop.permute.xlu0 %1151
        %s1154 = scalar_lea.vmem [#allocation4], 16
        %1155 = vst.msk [vmem:[%s1154] sm:$0xff] %vm1117, %v1152
        %1156 = vrot.lane.b32.xlu0 %v1116, 32
        %v1157 = vpop.permute.xlu0 %1156
        %s1159 = scalar_lea.vmem [#allocation2], 24
        %1160 = vst.msk [vmem:[%s1159] sm:$0xff] %vm1117, %v1157
        %1161 = vrot.lane.b32.xlu0 %v1119, 32
        %v1162 = vpop.permute.xlu0 %1161
        %s1164 = scalar_lea.vmem [#allocation3], 24
        %1165 = vst.msk [vmem:[%s1164] sm:$0xff] %vm1117, %v1162
        %1166 = vrot.lane.b32.xlu0 %v1121, 32
        %v1167 = vpop.permute.xlu0 %1166
        %s1169 = scalar_lea.vmem [#allocation4], 24
        %1170 = vst.msk [vmem:[%s1169] sm:$0xff] %vm1117, %v1167
        %v1171 = vld [vmem:[#allocation2] sm:$0xff]
        %v1172 = vld [vmem:[#allocation2 + $0x8] sm:$0xff]
        %v1173 = vld [vmem:[#allocation2 + $0x10] sm:$0xff]
        %v1174 = vld [vmem:[#allocation2 + $0x18] sm:$0xff]
        %v1175 = vld [vmem:[#allocation3] sm:$0xff]
        %v1176 = vld [vmem:[#allocation3 + $0x8] sm:$0xff]
        %v1177 = vld [vmem:[#allocation3 + $0x10] sm:$0xff]
        %v1178 = vld [vmem:[#allocation3 + $0x18] sm:$0xff]
        %v1180 = vsel %vm1117, %v1171, 0
        %v1183 = vsel %vm1117, %v1175, 0
        %1185 = vmatprep.subr.bf16.mxu0 0
        %1186 = vmatpush1.bf16.xpose.msra.mxu0 %v1183
        %1187 = vmatprep.subr.bf16.mxu0 0
        %1188 = vmatpush1.bf16.xpose.msra.mxu0 0
        %1189 = vmatprep.subr.bf16.mxu0 0
        %1190 = vmatpush1.bf16.xpose.msra.mxu0 0
        %1191 = vmatprep.subr.bf16.mxu0 0
        %1192 = vmatpush1.bf16.xpose.msra.mxu0 0
        %1193 = vmatprep.subr.bf16.mxu0 0
        %1194 = vmatpush1.bf16.xpose.msra.mxu0 0
        %1195 = vmatprep.subr.bf16.mxu0 0
        %1196 = vmatpush1.bf16.xpose.msra.mxu0 0
        %1197 = vmatprep.subr.bf16.mxu0 0
        %1198 = vmatpush1.bf16.xpose.msra.mxu0 0
        %1199 = vmatprep.subr.bf16.mxu0 0
        %1200 = vmatpush1.bf16.xpose.msra.mxu0 0
        %1201 = vmatprep.subr.bf16.mxu0 0
        %1202 = vmatpush1.bf16.xpose.msra.mxu0 0
        %1203 = vmatprep.subr.bf16.mxu0 0
        %1204 = vmatpush1.bf16.xpose.msra.mxu0 0
        %1205 = vmatprep.subr.bf16.mxu0 0
        %1206 = vmatpush1.bf16.xpose.msra.mxu0 0
        %1207 = vmatprep.subr.bf16.mxu0 0
        %1208 = vmatpush1.bf16.xpose.msra.mxu0 0
        %1209 = vmatprep.subr.bf16.mxu0 0
        %1210 = vmatpush1.bf16.xpose.msra.mxu0 0
        %1211 = vmatprep.subr.bf16.mxu0 0
        %1212 = vmatpush1.bf16.xpose.msra.mxu0 0
        %1213 = vmatprep.subr.bf16.mxu0 0
        %1214 = vmatpush1.bf16.xpose.msra.mxu0 0
        %1215 = vmatprep.subr.bf16.mxu0 0
        %1216 = vmatpush1.bf16.xpose.msra.mxu0 0
        %1217 = vmatprep.mubr.bf16.mxu0 0
        %1218 = vmatmul.mubr.bf16.gmra.mrb[0].mxu0 %v1180
        %v1219 = vpop.f32.mrb[0].mxu0
        %v1220 = vadd.f32 0.0, %v1219
        %v1221 = vpop.f32.mrb[0].mxu0
        %v1222 = vpop.f32.mrb[0].mxu0
        %v1223 = vadd.f32 0.0, %v1222
        %v1224 = vpop.f32.mrb[0].mxu0
        %1225 = vdwg.mxu0
        %v1227 = vsel %vm1117, %v1172, 0
        %v1230 = vsel %vm1117, %v1176, 0
        %1232 = vmatprep.subr.bf16.mxu0 0
        %1233 = vmatpush1.bf16.xpose.msra.mxu0 %v1230
        %1234 = vmatprep.subr.bf16.mxu0 0
        %1235 = vmatpush1.bf16.xpose.msra.mxu0 0
        %1236 = vmatprep.subr.bf16.mxu0 0
        %1237 = vmatpush1.bf16.xpose.msra.mxu0 0
        %1238 = vmatprep.subr.bf16.mxu0 0
        %1239 = vmatpush1.bf16.xpose.msra.mxu0 0
        %1240 = vmatprep.subr.bf16.mxu0 0
        %1241 = vmatpush1.bf16.xpose.msra.mxu0 0
        %1242 = vmatprep.subr.bf16.mxu0 0
        %1243 = vmatpush1.bf16.xpose.msra.mxu0 0
        %1244 = vmatprep.subr.bf16.mxu0 0
        %1245 = vmatpush1.bf16.xpose.msra.mxu0 0
        %1246 = vmatprep.subr.bf16.mxu0 0
        %1247 = vmatpush1.bf16.xpose.msra.mxu0 0
        %1248 = vmatprep.subr.bf16.mxu0 0
        %1249 = vmatpush1.bf16.xpose.msra.mxu0 0
        %1250 = vmatprep.subr.bf16.mxu0 0
        %1251 = vmatpush1.bf16.xpose.msra.mxu0 0
        %1252 = vmatprep.subr.bf16.mxu0 0
        %1253 = vmatpush1.bf16.xpose.msra.mxu0 0
        %1254 = vmatprep.subr.bf16.mxu0 0
        %1255 = vmatpush1.bf16.xpose.msra.mxu0 0
        %1256 = vmatprep.subr.bf16.mxu0 0
        %1257 = vmatpush1.bf16.xpose.msra.mxu0 0
        %1258 = vmatprep.subr.bf16.mxu0 0
        %1259 = vmatpush1.bf16.xpose.msra.mxu0 0
        %1260 = vmatprep.subr.bf16.mxu0 0
        %1261 = vmatpush1.bf16.xpose.msra.mxu0 0
        %1262 = vmatprep.subr.bf16.mxu0 0
        %1263 = vmatpush1.bf16.xpose.msra.mxu0 0
        %1264 = vmatprep.mubr.bf16.mxu0 0
        %1265 = vmatmul.mubr.bf16.gmra.mrb[0].mxu0 %v1227
        %v1266 = vpop.f32.mrb[0].mxu0
        %v1267 = vadd.f32 0.0, %v1266
        %v1268 = vpop.f32.mrb[0].mxu0
        %v1269 = vpop.f32.mrb[0].mxu0
        %v1270 = vadd.f32 0.0, %v1269
        %v1271 = vpop.f32.mrb[0].mxu0
        %1272 = vdwg.mxu0
        %v1274 = vsel %vm1117, %v1173, 0
        %v1277 = vsel %vm1117, %v1177, 0
        %1279 = vmatprep.subr.bf16.mxu0 0
        %1280 = vmatpush1.bf16.xpose.msra.mxu0 %v1277
        %1281 = vmatprep.subr.bf16.mxu0 0
        %1282 = vmatpush1.bf16.xpose.msra.mxu0 0
        %1283 = vmatprep.subr.bf16.mxu0 0
        %1284 = vmatpush1.bf16.xpose.msra.mxu0 0
        %1285 = vmatprep.subr.bf16.mxu0 0
        %1286 = vmatpush1.bf16.xpose.msra.mxu0 0
        %1287 = vmatprep.subr.bf16.mxu0 0
        %1288 = vmatpush1.bf16.xpose.msra.mxu0 0
        %1289 = vmatprep.subr.bf16.mxu0 0
        %1290 = vmatpush1.bf16.xpose.msra.mxu0 0
        %1291 = vmatprep.subr.bf16.mxu0 0
        %1292 = vmatpush1.bf16.xpose.msra.mxu0 0
        %1293 = vmatprep.subr.bf16.mxu0 0
        %1294 = vmatpush1.bf16.xpose.msra.mxu0 0
        %1295 = vmatprep.subr.bf16.mxu0 0
        %1296 = vmatpush1.bf16.xpose.msra.mxu0 0
        %1297 = vmatprep.subr.bf16.mxu0 0
        %1298 = vmatpush1.bf16.xpose.msra.mxu0 0
        %1299 = vmatprep.subr.bf16.mxu0 0
        %1300 = vmatpush1.bf16.xpose.msra.mxu0 0
        %1301 = vmatprep.subr.bf16.mxu0 0
        %1302 = vmatpush1.bf16.xpose.msra.mxu0 0
        %1303 = vmatprep.subr.bf16.mxu0 0
        %1304 = vmatpush1.bf16.xpose.msra.mxu0 0
        %1305 = vmatprep.subr.bf16.mxu0 0
        %1306 = vmatpush1.bf16.xpose.msra.mxu0 0
        %1307 = vmatprep.subr.bf16.mxu0 0
        %1308 = vmatpush1.bf16.xpose.msra.mxu0 0
        %1309 = vmatprep.subr.bf16.mxu0 0
        %1310 = vmatpush1.bf16.xpose.msra.mxu0 0
        %1311 = vmatprep.mubr.bf16.mxu0 0
        %1312 = vmatmul.mubr.bf16.gmra.mrb[0].mxu0 %v1274
        %v1313 = vpop.f32.mrb[0].mxu0
        %v1314 = vadd.f32 0.0, %v1313
        %v1315 = vpop.f32.mrb[0].mxu0
        %v1316 = vpop.f32.mrb[0].mxu0
        %v1317 = vadd.f32 0.0, %v1316
        %v1318 = vpop.f32.mrb[0].mxu0
        %1319 = vdwg.mxu0
        %v1321 = vsel %vm1117, %v1174, 0
        %v1324 = vsel %vm1117, %v1178, 0
        %1326 = vmatprep.subr.bf16.mxu0 0
        %1327 = vmatpush1.bf16.xpose.msra.mxu0 %v1324
        %1328 = vmatprep.subr.bf16.mxu0 0
        %1329 = vmatpush1.bf16.xpose.msra.mxu0 0
        %1330 = vmatprep.subr.bf16.mxu0 0
        %1331 = vmatpush1.bf16.xpose.msra.mxu0 0
        %1332 = vmatprep.subr.bf16.mxu0 0
        %1333 = vmatpush1.bf16.xpose.msra.mxu0 0
        %1334 = vmatprep.subr.bf16.mxu0 0
        %1335 = vmatpush1.bf16.xpose.msra.mxu0 0
        %1336 = vmatprep.subr.bf16.mxu0 0
        %1337 = vmatpush1.bf16.xpose.msra.mxu0 0
        %1338 = vmatprep.subr.bf16.mxu0 0
        %1339 = vmatpush1.bf16.xpose.msra.mxu0 0
        %1340 = vmatprep.subr.bf16.mxu0 0
        %1341 = vmatpush1.bf16.xpose.msra.mxu0 0
        %1342 = vmatprep.subr.bf16.mxu0 0
        %1343 = vmatpush1.bf16.xpose.msra.mxu0 0
        %1344 = vmatprep.subr.bf16.mxu0 0
        %1345 = vmatpush1.bf16.xpose.msra.mxu0 0
        %1346 = vmatprep.subr.bf16.mxu0 0
        %1347 = vmatpush1.bf16.xpose.msra.mxu0 0
        %1348 = vmatprep.subr.bf16.mxu0 0
        %1349 = vmatpush1.bf16.xpose.msra.mxu0 0
        %1350 = vmatprep.subr.bf16.mxu0 0
        %1351 = vmatpush1.bf16.xpose.msra.mxu0 0
        %1352 = vmatprep.subr.bf16.mxu0 0
        %1353 = vmatpush1.bf16.xpose.msra.mxu0 0
        %1354 = vmatprep.subr.bf16.mxu0 0
        %1355 = vmatpush1.bf16.xpose.msra.mxu0 0
        %1356 = vmatprep.subr.bf16.mxu0 0
        %1357 = vmatpush1.bf16.xpose.msra.mxu0 0
        %1358 = vmatprep.mubr.bf16.mxu0 0
        %1359 = vmatmul.mubr.bf16.gmra.mrb[0].mxu0 %v1321
        %v1360 = vpop.f32.mrb[0].mxu0
        %v1361 = vadd.f32 0.0, %v1360
        %v1362 = vpop.f32.mrb[0].mxu0
        %v1363 = vpop.f32.mrb[0].mxu0
        %v1364 = vadd.f32 0.0, %v1363
        %v1365 = vpop.f32.mrb[0].mxu0
        %1366 = vdwg.mxu0
        %v1367 = vmul.f32 %v1220, 0.17677669
        %v1368 = vmul.f32 %v1223, 0.17677669
        %v1369 = vmul.f32 %v1267, 0.17677669
        %v1370 = vmul.f32 %v1270, 0.17677669
        %v1371 = vmul.f32 %v1314, 0.17677669
        %v1372 = vmul.f32 %v1317, 0.17677669
        %v1373 = vmul.f32 %v1361, 0.17677669
        %v1374 = vmul.f32 %v1364, 0.17677669
        %vm1375 = vcmask 130048
        %v1376 = vsel %vm1375, %v1367, -inf
        %1377 = vmax.xlane.f32.xlu0 %v1376
        %v1378 = vpop.xlane.xlu0 %1377
        %v1379 = vsel %vm1375, %v1368, -inf
        %1380 = vmax.xlane.f32.xlu0 %v1379
        %v1381 = vpop.xlane.xlu0 %1380
        %v1382 = vsel %vm1375, %v1369, -inf
        %1383 = vmax.xlane.f32.xlu0 %v1382
        %v1384 = vpop.xlane.xlu0 %1383
        %v1385 = vsel %vm1375, %v1370, -inf
        %1386 = vmax.xlane.f32.xlu0 %v1385
        %v1387 = vpop.xlane.xlu0 %1386
        %v1388 = vsel %vm1375, %v1371, -inf
        %1389 = vmax.xlane.f32.xlu0 %v1388
        %v1390 = vpop.xlane.xlu0 %1389
        %v1391 = vsel %vm1375, %v1372, -inf
        %1392 = vmax.xlane.f32.xlu0 %v1391
        %v1393 = vpop.xlane.xlu0 %1392
        %v1394 = vsel %vm1375, %v1373, -inf
        %1395 = vmax.xlane.f32.xlu0 %v1394
        %v1396 = vpop.xlane.xlu0 %1395
        %v1397 = vsel %vm1375, %v1374, -inf
        %1398 = vmax.xlane.f32.xlu0 %v1397
        %v1399 = vpop.xlane.xlu0 %1398
        %v1400 = vsub.f32 %v1367, %v1378
        %v1401 = vsub.f32 %v1368, %v1381
        %v1402 = vsub.f32 %v1369, %v1384
        %v1403 = vsub.f32 %v1370, %v1387
        %v1404 = vsub.f32 %v1371, %v1390
        %v1405 = vsub.f32 %v1372, %v1393
        %v1406 = vsub.f32 %v1373, %v1396
        %v1407 = vsub.f32 %v1374, %v1399
        %v1408 = vmul.f32 %v1400, 1.442695
        %v1409 = vpow.pop %v1408
        %v1410 = vmul.f32 %v1401, 1.442695
        %v1411 = vpow.pop %v1410
        %v1412 = vmul.f32 %v1402, 1.442695
        %v1413 = vpow.pop %v1412
        %v1414 = vmul.f32 %v1403, 1.442695
        %v1415 = vpow.pop %v1414
        %v1416 = vmul.f32 %v1404, 1.442695
        %v1417 = vpow.pop %v1416
        %v1418 = vmul.f32 %v1405, 1.442695
        %v1419 = vpow.pop %v1418
        %v1420 = vmul.f32 %v1406, 1.442695
        %v1421 = vpow.pop %v1420
        %v1422 = vmul.f32 %v1407, 1.442695
        %v1423 = vpow.pop %v1422
        %v1424 = vsel %vm1375, %v1409, 0.0
        %1425 = vadd.xlane.f32.xlu0 %v1424
        %v1426 = vpop.xlane.xlu0 %1425
        %v1427 = vsel %vm1375, %v1411, 0.0
        %1428 = vadd.xlane.f32.xlu0 %v1427
        %v1429 = vpop.xlane.xlu0 %1428
        %v1430 = vsel %vm1375, %v1413, 0.0
        %1431 = vadd.xlane.f32.xlu0 %v1430
        %v1432 = vpop.xlane.xlu0 %1431
        %v1433 = vsel %vm1375, %v1415, 0.0
        %1434 = vadd.xlane.f32.xlu0 %v1433
        %v1435 = vpop.xlane.xlu0 %1434
        %v1436 = vsel %vm1375, %v1417, 0.0
        %1437 = vadd.xlane.f32.xlu0 %v1436
        %v1438 = vpop.xlane.xlu0 %1437
        %v1439 = vsel %vm1375, %v1419, 0.0
        %1440 = vadd.xlane.f32.xlu0 %v1439
        %v1441 = vpop.xlane.xlu0 %1440
        %v1442 = vsel %vm1375, %v1421, 0.0
        %1443 = vadd.xlane.f32.xlu0 %v1442
        %v1444 = vpop.xlane.xlu0 %1443
        %v1445 = vsel %vm1375, %v1423, 0.0
        %1446 = vadd.xlane.f32.xlu0 %v1445
        %v1447 = vpop.xlane.xlu0 %1446
        %v1448 = vrcp.pop %v1426
        %v1449 = vrcp.pop %v1429
        %v1450 = vrcp.pop %v1432
        %v1451 = vrcp.pop %v1435
        %v1452 = vrcp.pop %v1438
        %v1453 = vrcp.pop %v1441
        %v1454 = vrcp.pop %v1444
        %v1455 = vrcp.pop %v1447
        %v1456 = vmul.f32 %v1409, %v1448
        %v1457 = vmul.f32 %v1411, %v1449
        %v1458 = vmul.f32 %v1413, %v1450
        %v1459 = vmul.f32 %v1415, %v1451
        %v1460 = vmul.f32 %v1417, %v1452
        %v1461 = vmul.f32 %v1419, %v1453
        %v1462 = vmul.f32 %v1421, %v1454
        %v1463 = vmul.f32 %v1423, %v1455
        %v1464 = vpack.c.bf16 %v1457, %v1456
        %v1465 = vpack.c.bf16 %v1459, %v1458
        %v1466 = vpack.c.bf16 %v1461, %v1460
        %v1467 = vpack.c.bf16 %v1463, %v1462
        %v1468 = vld [vmem:[#allocation4] sm:$0xff]
        %v1469 = vld [vmem:[#allocation4 + $0x8] sm:$0xff]
        %v1470 = vld [vmem:[#allocation4 + $0x10] sm:$0xff]
        %v1471 = vld [vmem:[#allocation4 + $0x18] sm:$0xff]
        %v1473 = vsel %vm1375, %v1464, 0
        %1475 = vmatprep.subr.bf16.mxu0 0
        %1476 = vmatpush1.bf16.msra.mxu0 %v1468
        %1477 = vmatprep.subr.bf16.mxu0 0
        %1478 = vmatpush1.bf16.msra.mxu0 0
        %1479 = vmatprep.subr.bf16.mxu0 0
        %1480 = vmatpush1.bf16.msra.mxu0 0
        %1481 = vmatprep.subr.bf16.mxu0 0
        %1482 = vmatpush1.bf16.msra.mxu0 0
        %1483 = vmatprep.subr.bf16.mxu0 0
        %1484 = vmatpush1.bf16.msra.mxu0 0
        %1485 = vmatprep.subr.bf16.mxu0 0
        %1486 = vmatpush1.bf16.msra.mxu0 0
        %1487 = vmatprep.subr.bf16.mxu0 0
        %1488 = vmatpush1.bf16.msra.mxu0 0
        %1489 = vmatprep.subr.bf16.mxu0 0
        %1490 = vmatpush1.bf16.msra.mxu0 0
        %1491 = vmatprep.subr.bf16.mxu0 0
        %1492 = vmatpush1.bf16.msra.mxu0 0
        %1493 = vmatprep.subr.bf16.mxu0 0
        %1494 = vmatpush1.bf16.msra.mxu0 0
        %1495 = vmatprep.subr.bf16.mxu0 0
        %1496 = vmatpush1.bf16.msra.mxu0 0
        %1497 = vmatprep.subr.bf16.mxu0 0
        %1498 = vmatpush1.bf16.msra.mxu0 0
        %1499 = vmatprep.subr.bf16.mxu0 0
        %1500 = vmatpush1.bf16.msra.mxu0 0
        %1501 = vmatprep.subr.bf16.mxu0 0
        %1502 = vmatpush1.bf16.msra.mxu0 0
        %1503 = vmatprep.subr.bf16.mxu0 0
        %1504 = vmatpush1.bf16.msra.mxu0 0
        %1505 = vmatprep.subr.bf16.mxu0 0
        %1506 = vmatpush1.bf16.msra.mxu0 0
        %1507 = vmatprep.mubr.bf16.mxu0 0
        %1508 = vmatmul.mubr.bf16.gmra.mrb[0].mxu0 %v1473
        %v1509 = vpop.f32.mrb[0].mxu0
        %v1510 = vadd.f32 0.0, %v1509
        %v1511 = vpop.f32.mrb[0].mxu0
        %v1512 = vpop.f32.mrb[0].mxu0
        %v1513 = vadd.f32 0.0, %v1512
        %v1514 = vpop.f32.mrb[0].mxu0
        %1515 = vdwg.mxu0
        %v1517 = vsel %vm1375, %v1465, 0
        %1519 = vmatprep.subr.bf16.mxu0 0
        %1520 = vmatpush1.bf16.msra.mxu0 %v1469
        %1521 = vmatprep.subr.bf16.mxu0 0
        %1522 = vmatpush1.bf16.msra.mxu0 0
        %1523 = vmatprep.subr.bf16.mxu0 0
        %1524 = vmatpush1.bf16.msra.mxu0 0
        %1525 = vmatprep.subr.bf16.mxu0 0
        %1526 = vmatpush1.bf16.msra.mxu0 0
        %1527 = vmatprep.subr.bf16.mxu0 0
        %1528 = vmatpush1.bf16.msra.mxu0 0
        %1529 = vmatprep.subr.bf16.mxu0 0
        %1530 = vmatpush1.bf16.msra.mxu0 0
        %1531 = vmatprep.subr.bf16.mxu0 0
        %1532 = vmatpush1.bf16.msra.mxu0 0
        %1533 = vmatprep.subr.bf16.mxu0 0
        %1534 = vmatpush1.bf16.msra.mxu0 0
        %1535 = vmatprep.subr.bf16.mxu0 0
        %1536 = vmatpush1.bf16.msra.mxu0 0
        %1537 = vmatprep.subr.bf16.mxu0 0
        %1538 = vmatpush1.bf16.msra.mxu0 0
        %1539 = vmatprep.subr.bf16.mxu0 0
        %1540 = vmatpush1.bf16.msra.mxu0 0
        %1541 = vmatprep.subr.bf16.mxu0 0
        %1542 = vmatpush1.bf16.msra.mxu0 0
        %1543 = vmatprep.subr.bf16.mxu0 0
        %1544 = vmatpush1.bf16.msra.mxu0 0
        %1545 = vmatprep.subr.bf16.mxu0 0
        %1546 = vmatpush1.bf16.msra.mxu0 0
        %1547 = vmatprep.subr.bf16.mxu0 0
        %1548 = vmatpush1.bf16.msra.mxu0 0
        %1549 = vmatprep.subr.bf16.mxu0 0
        %1550 = vmatpush1.bf16.msra.mxu0 0
        %1551 = vmatprep.mubr.bf16.mxu0 0
        %1552 = vmatmul.mubr.bf16.gmra.mrb[0].mxu0 %v1517
        %v1553 = vpop.f32.mrb[0].mxu0
        %v1554 = vadd.f32 0.0, %v1553
        %v1555 = vpop.f32.mrb[0].mxu0
        %v1556 = vpop.f32.mrb[0].mxu0
        %v1557 = vadd.f32 0.0, %v1556
        %v1558 = vpop.f32.mrb[0].mxu0
        %1559 = vdwg.mxu0
        %v1561 = vsel %vm1375, %v1466, 0
        %1563 = vmatprep.subr.bf16.mxu0 0
        %1564 = vmatpush1.bf16.msra.mxu0 %v1470
        %1565 = vmatprep.subr.bf16.mxu0 0
        %1566 = vmatpush1.bf16.msra.mxu0 0
        %1567 = vmatprep.subr.bf16.mxu0 0
        %1568 = vmatpush1.bf16.msra.mxu0 0
        %1569 = vmatprep.subr.bf16.mxu0 0
        %1570 = vmatpush1.bf16.msra.mxu0 0
        %1571 = vmatprep.subr.bf16.mxu0 0
        %1572 = vmatpush1.bf16.msra.mxu0 0
        %1573 = vmatprep.subr.bf16.mxu0 0
        %1574 = vmatpush1.bf16.msra.mxu0 0
        %1575 = vmatprep.subr.bf16.mxu0 0
        %1576 = vmatpush1.bf16.msra.mxu0 0
        %1577 = vmatprep.subr.bf16.mxu0 0
        %1578 = vmatpush1.bf16.msra.mxu0 0
        %1579 = vmatprep.subr.bf16.mxu0 0
        %1580 = vmatpush1.bf16.msra.mxu0 0
        %1581 = vmatprep.subr.bf16.mxu0 0
        %1582 = vmatpush1.bf16.msra.mxu0 0
        %1583 = vmatprep.subr.bf16.mxu0 0
        %1584 = vmatpush1.bf16.msra.mxu0 0
        %1585 = vmatprep.subr.bf16.mxu0 0
        %1586 = vmatpush1.bf16.msra.mxu0 0
        %1587 = vmatprep.subr.bf16.mxu0 0
        %1588 = vmatpush1.bf16.msra.mxu0 0
        %1589 = vmatprep.subr.bf16.mxu0 0
        %1590 = vmatpush1.bf16.msra.mxu0 0
        %1591 = vmatprep.subr.bf16.mxu0 0
        %1592 = vmatpush1.bf16.msra.mxu0 0
        %1593 = vmatprep.subr.bf16.mxu0 0
        %1594 = vmatpush1.bf16.msra.mxu0 0
        %1595 = vmatprep.mubr.bf16.mxu0 0
        %1596 = vmatmul.mubr.bf16.gmra.mrb[0].mxu0 %v1561
        %v1597 = vpop.f32.mrb[0].mxu0
        %v1598 = vadd.f32 0.0, %v1597
        %v1599 = vpop.f32.mrb[0].mxu0
        %v1600 = vpop.f32.mrb[0].mxu0
        %v1601 = vadd.f32 0.0, %v1600
        %v1602 = vpop.f32.mrb[0].mxu0
        %1603 = vdwg.mxu0
        %v1605 = vsel %vm1375, %v1467, 0
        %1607 = vmatprep.subr.bf16.mxu0 0
        %1608 = vmatpush1.bf16.msra.mxu0 %v1471
        %1609 = vmatprep.subr.bf16.mxu0 0
        %1610 = vmatpush1.bf16.msra.mxu0 0
        %1611 = vmatprep.subr.bf16.mxu0 0
        %1612 = vmatpush1.bf16.msra.mxu0 0
        %1613 = vmatprep.subr.bf16.mxu0 0
        %1614 = vmatpush1.bf16.msra.mxu0 0
        %1615 = vmatprep.subr.bf16.mxu0 0
        %1616 = vmatpush1.bf16.msra.mxu0 0
        %1617 = vmatprep.subr.bf16.mxu0 0
        %1618 = vmatpush1.bf16.msra.mxu0 0
        %1619 = vmatprep.subr.bf16.mxu0 0
        %1620 = vmatpush1.bf16.msra.mxu0 0
        %1621 = vmatprep.subr.bf16.mxu0 0
        %1622 = vmatpush1.bf16.msra.mxu0 0
        %1623 = vmatprep.subr.bf16.mxu0 0
        %1624 = vmatpush1.bf16.msra.mxu0 0
        %1625 = vmatprep.subr.bf16.mxu0 0
        %1626 = vmatpush1.bf16.msra.mxu0 0
        %1627 = vmatprep.subr.bf16.mxu0 0
        %1628 = vmatpush1.bf16.msra.mxu0 0
        %1629 = vmatprep.subr.bf16.mxu0 0
        %1630 = vmatpush1.bf16.msra.mxu0 0
        %1631 = vmatprep.subr.bf16.mxu0 0
        %1632 = vmatpush1.bf16.msra.mxu0 0
        %1633 = vmatprep.subr.bf16.mxu0 0
        %1634 = vmatpush1.bf16.msra.mxu0 0
        %1635 = vmatprep.subr.bf16.mxu0 0
        %1636 = vmatpush1.bf16.msra.mxu0 0
        %1637 = vmatprep.subr.bf16.mxu0 0
        %1638 = vmatpush1.bf16.msra.mxu0 0
        %1639 = vmatprep.mubr.bf16.mxu0 0
        %1640 = vmatmul.mubr.bf16.gmra.mrb[0].mxu0 %v1605
        %v1641 = vpop.f32.mrb[0].mxu0
        %v1642 = vadd.f32 0.0, %v1641
        %v1643 = vpop.f32.mrb[0].mxu0
        %v1644 = vpop.f32.mrb[0].mxu0
        %v1645 = vadd.f32 0.0, %v1644
        %v1646 = vpop.f32.mrb[0].mxu0
        %1647 = vdwg.mxu0
        %v1648 = vpack.c.bf16 %v1513, %v1510
        %1649 = vst.msk [vmem:[#allocation5] sm:$0xff] %vm1117, %v1648
        %v1650 = vpack.c.bf16 %v1557, %v1554
        %1652 = vrot.lane.b32.xlu0 %v1650, 32
        %v1653 = vpop.permute.xlu0 %1652
        %vm1655 = vcmask 523520
        %1656 = vst.msk [vmem:[#allocation5] sm:$0xff] %vm1655, %v1653
        %v1657 = vpack.c.bf16 %v1601, %v1598
        %1659 = vrot.lane.b32.xlu0 %v1657, 64
        %v1660 = vpop.permute.xlu0 %1659
        %vm1662 = vcmask 785920
        %1663 = vst.msk [vmem:[#allocation5] sm:$0xff] %vm1662, %v1660
        %v1664 = vpack.c.bf16 %v1645, %v1642
        %1666 = vrot.lane.b32.xlu0 %v1664, 96
        %v1667 = vpop.permute.xlu0 %1666
        %vm1669 = vcmask 1048320
        %1670 = vst.msk [vmem:[#allocation5] sm:$0xff] %vm1669, %v1667
        %v1671 = vld [vmem:[#allocation5] sm:$0xff]
        %v1672 = vld [vmem:[%s660] sm:$0xf]
        %v1673 = vld [vmem:[%s660 + $0x4] sm:$0xf]
        %v1674 = vld [vmem:[%s660 + $0x8] sm:$0xf]
        %v1675 = vld [vmem:[%s660 + $0xc] sm:$0xf]
        %v1676 = vld [vmem:[%s660 + $0x10] sm:$0xf]
        %v1677 = vld [vmem:[%s660 + $0x14] sm:$0xf]
        %v1678 = vld [vmem:[%s660 + $0x18] sm:$0xf]
        %v1679 = vld [vmem:[%s660 + $0x1c] sm:$0xf]
        %v1680 = vld [vmem:[%s660 + $0x20] sm:$0xf]
        %v1681 = vld [vmem:[%s660 + $0x24] sm:$0xf]
        %v1682 = vld [vmem:[%s660 + $0x28] sm:$0xf]
        %v1683 = vld [vmem:[%s660 + $0x2c] sm:$0xf]
        %v1684 = vld [vmem:[%s660 + $0x30] sm:$0xf]
        %v1685 = vld [vmem:[%s660 + $0x34] sm:$0xf]
        %v1686 = vld [vmem:[%s660 + $0x38] sm:$0xf]
        %v1687 = vld [vmem:[%s660 + $0x3c] sm:$0xf]
        %v1704 = vunpack.c.l.b16 %v1672
        %v1705 = vunpack.c.l.b16 %v1673
        %v1706 = vunpack.c.l.b16 %v1674
        %v1707 = vunpack.c.l.b16 %v1675
        %v1708 = vunpack.c.l.b16 %v1676
        %v1709 = vunpack.c.l.b16 %v1677
        %v1710 = vunpack.c.l.b16 %v1678
        %v1711 = vunpack.c.l.b16 %v1679
        %v1712 = vunpack.c.l.b16 %v1680
        %v1713 = vunpack.c.l.b16 %v1681
        %v1714 = vunpack.c.l.b16 %v1682
        %v1715 = vunpack.c.l.b16 %v1683
        %v1716 = vunpack.c.l.b16 %v1684
        %v1717 = vunpack.c.l.b16 %v1685
        %v1718 = vunpack.c.l.b16 %v1686
        %v1719 = vunpack.c.l.b16 %v1687
        %v1720 = vpack.c.b16 %v1705, %v1704
        %v1721 = vpack.c.b16 %v1707, %v1706
        %v1722 = vpack.c.b16 %v1709, %v1708
        %v1723 = vpack.c.b16 %v1711, %v1710
        %v1724 = vpack.c.b16 %v1713, %v1712
        %v1725 = vpack.c.b16 %v1715, %v1714
        %v1726 = vpack.c.b16 %v1717, %v1716
        %v1727 = vpack.c.b16 %v1719, %v1718
        %1736 = vmatprep.subr.bf16.mxu0 0
        %1737 = vmatpush1.bf16.msra.mxu0 %v1720
        %1738 = vmatprep.subr.bf16.mxu0 0
        %1739 = vmatpush1.bf16.msra.mxu0 %v1721
        %1740 = vmatprep.subr.bf16.mxu0 0
        %1741 = vmatpush1.bf16.msra.mxu0 %v1722
        %1742 = vmatprep.subr.bf16.mxu0 0
        %1743 = vmatpush1.bf16.msra.mxu0 %v1723
        %1744 = vmatprep.subr.bf16.mxu0 0
        %1745 = vmatpush1.bf16.msra.mxu0 %v1724
        %1746 = vmatprep.subr.bf16.mxu0 0
        %1747 = vmatpush1.bf16.msra.mxu0 %v1725
        %1748 = vmatprep.subr.bf16.mxu0 0
        %1749 = vmatpush1.bf16.msra.mxu0 %v1726
        %1750 = vmatprep.subr.bf16.mxu0 0
        %1751 = vmatpush1.bf16.msra.mxu0 %v1727
        %1752 = vmatprep.subr.bf16.mxu0 0
        %1753 = vmatpush1.bf16.msra.mxu0 0
        %1754 = vmatprep.subr.bf16.mxu0 0
        %1755 = vmatpush1.bf16.msra.mxu0 0
        %1756 = vmatprep.subr.bf16.mxu0 0
        %1757 = vmatpush1.bf16.msra.mxu0 0
        %1758 = vmatprep.subr.bf16.mxu0 0
        %1759 = vmatpush1.bf16.msra.mxu0 0
        %1760 = vmatprep.subr.bf16.mxu0 0
        %1761 = vmatpush1.bf16.msra.mxu0 0
        %1762 = vmatprep.subr.bf16.mxu0 0
        %1763 = vmatpush1.bf16.msra.mxu0 0
        %1764 = vmatprep.subr.bf16.mxu0 0
        %1765 = vmatpush1.bf16.msra.mxu0 0
        %1766 = vmatprep.subr.bf16.mxu0 0
        %1767 = vmatpush1.bf16.msra.mxu0 0
        %1768 = vmatprep.mubr.bf16.mxu0 0
        %1769 = vmatmul.mubr.bf16.gmra.mrb[0].mxu0 %v1671
        %v1770 = vpop.f32.mrb[0].mxu0
        %v1771 = vadd.f32 0.0, %v1770
        %v1772 = vpop.f32.mrb[0].mxu0
        %v1773 = vpop.f32.mrb[0].mxu0
        %v1774 = vadd.f32 0.0, %v1773
        %v1775 = vpop.f32.mrb[0].mxu0
        %1776 = vdwg.mxu0
        %v1777 = vadd.f32 %v798, %v1771
        %v1778 = vadd.f32 %v799, %v1774
        %v1779 = vld [vmem:[%s779] sm:$0x1]
        %v1780 = vld [vmem:[%s782] sm:$0x1]
        %1781 = vadd.xlane.f32.xlu0 %v1777
        %v1782 = vpop.xlane.xlu0 %1781
        %1783 = vadd.xlane.f32.xlu0 %v1778
        %v1784 = vpop.xlane.xlu0 %1783
        %v1785 = vrcp.pop 128.0
        %v1786 = vmul.f32 %v1782, %v1785
        %v1787 = vmul.f32 %v1784, %v1785
        %v1788 = vsub.f32 %v1777, %v1786
        %v1789 = vsub.f32 %v1778, %v1787
        %v1790 = vmul.f32 %v1788, %v1788
        %v1791 = vmul.f32 %v1789, %v1789
        %1792 = vadd.xlane.f32.xlu0 %v1790
        %v1793 = vpop.xlane.xlu0 %1792
        %1794 = vadd.xlane.f32.xlu0 %v1791
        %v1795 = vpop.xlane.xlu0 %1794
        %v1796 = vmul.f32 %v1793, %v1785
        %v1797 = vmul.f32 %v1795, %v1785
        %v1798 = vadd.f32 %v1796, 1e-05
        %v1799 = vadd.f32 %v1797, 1e-05
        %v1800 = vrsqrt.pop %v1798
        %v1801 = vrsqrt.pop %v1799
        %v1802 = vmul.f32 %v1788, %v1800
        %v1803 = vmul.f32 %v1789, %v1801
        %v1805 = vlaneseq
        %v1806 = vshrl.u32 %v1805, 7
        %v1807 = vsub.s32 0, %v1806
        %v1808 = vrot.slane %v1779, %v1807
        %v1810 = vmul.f32 %v1802, %v1808
        %v1811 = vmul.f32 %v1803, %v1808
        %v1813 = vlaneseq
        %v1814 = vshrl.u32 %v1813, 7
        %v1815 = vsub.s32 0, %v1814
        %v1816 = vrot.slane %v1780, %v1815
        %v1818 = vadd.f32 %v1810, %v1816
        %v1819 = vadd.f32 %v1811, %v1816
        %v1820 = vpack.c.bf16 %v1819, %v1818
        %v1821 = vld [vmem:[%s669] sm:$0xff]
        %v1822 = vld [vmem:[%s669 + $0x8] sm:$0xff]
        %v1823 = vld [vmem:[%s669 + $0x10] sm:$0xff]
        %v1824 = vld [vmem:[%s669 + $0x18] sm:$0xff]
        %v1825 = vld [vmem:[%s669 + $0x20] sm:$0xff]
        %v1826 = vld [vmem:[%s669 + $0x28] sm:$0xff]
        %v1827 = vld [vmem:[%s669 + $0x30] sm:$0xff]
        %v1828 = vld [vmem:[%s669 + $0x38] sm:$0xff]
        %v1829 = vld [vmem:[%s669 + $0x40] sm:$0xff]
        %v1830 = vld [vmem:[%s669 + $0x48] sm:$0xff]
        %v1831 = vld [vmem:[%s669 + $0x50] sm:$0xff]
        %v1832 = vld [vmem:[%s669 + $0x58] sm:$0xff]
        %v1833 = vld [vmem:[%s669 + $0x60] sm:$0xff]
        %v1834 = vld [vmem:[%s669 + $0x68] sm:$0xff]
        %v1835 = vld [vmem:[%s669 + $0x70] sm:$0xff]
        %v1836 = vld [vmem:[%s669 + $0x78] sm:$0xff]
        %v1837 = vld [vmem:[%s669 + $0x80] sm:$0xff]
        %v1838 = vld [vmem:[%s669 + $0x88] sm:$0xff]
        %v1839 = vld [vmem:[%s669 + $0x90] sm:$0xff]
        %v1840 = vld [vmem:[%s669 + $0x98] sm:$0xff]
        %v1841 = vld [vmem:[%s669 + $0xa0] sm:$0xff]
        %v1842 = vld [vmem:[%s669 + $0xa8] sm:$0xff]
        %v1843 = vld [vmem:[%s669 + $0xb0] sm:$0xff]
        %v1844 = vld [vmem:[%s669 + $0xb8] sm:$0xff]
        %v1845 = vld [vmem:[%s669 + $0xc0] sm:$0xff]
        %v1846 = vld [vmem:[%s669 + $0xc8] sm:$0xff]
        %v1847 = vld [vmem:[%s669 + $0xd0] sm:$0xff]
        %v1848 = vld [vmem:[%s669 + $0xd8] sm:$0xff]
        %v1849 = vld [vmem:[%s669 + $0xe0] sm:$0xff]
        %v1850 = vld [vmem:[%s669 + $0xe8] sm:$0xff]
        %v1851 = vld [vmem:[%s669 + $0xf0] sm:$0xff]
        %v1852 = vld [vmem:[%s669 + $0xf8] sm:$0xff]
        %v1853 = vld [vmem:[%s773] sm:$0xf]
        %v1855 = vlaneseq
        %v1856 = vshrl.u32 %v1855, 7
        %v1857 = vsub.s32 0, %v1856
        %v1858 = vrot.slane %v1853, %v1857
        %v1859 = vlaneseq
        %v1860 = vshrl.u32 %v1859, 7
        %v1861 = vsub.s32 1, %v1860
        %v1862 = vrot.slane %v1853, %v1861
        %v1863 = vlaneseq
        %v1864 = vshrl.u32 %v1863, 7
        %v1865 = vsub.s32 2, %v1864
        %v1866 = vrot.slane %v1853, %v1865
        %v1867 = vlaneseq
        %v1868 = vshrl.u32 %v1867, 7
        %v1869 = vsub.s32 3, %v1868
        %v1870 = vrot.slane %v1853, %v1869
        %v1907 = vunpack.c.l.b16 %v1821
        %v1908 = vunpack.c.h.b16 %v1821
        %v1909 = vunpack.c.l.b16 %v1822
        %v1910 = vunpack.c.h.b16 %v1822
        %v1911 = vunpack.c.l.b16 %v1823
        %v1912 = vunpack.c.h.b16 %v1823
        %v1913 = vunpack.c.l.b16 %v1824
        %v1914 = vunpack.c.h.b16 %v1824
        %v1915 = vunpack.c.l.b16 %v1825
        %v1916 = vunpack.c.h.b16 %v1825
        %v1917 = vunpack.c.l.b16 %v1826
        %v1918 = vunpack.c.h.b16 %v1826
        %v1919 = vunpack.c.l.b16 %v1827
        %v1920 = vunpack.c.h.b16 %v1827
        %v1921 = vunpack.c.l.b16 %v1828
        %v1922 = vunpack.c.h.b16 %v1828
        %v1923 = vunpack.c.l.b16 %v1829
        %v1924 = vunpack.c.h.b16 %v1829
        %v1925 = vunpack.c.l.b16 %v1830
        %v1926 = vunpack.c.h.b16 %v1830
        %v1927 = vunpack.c.l.b16 %v1831
        %v1928 = vunpack.c.h.b16 %v1831
        %v1929 = vunpack.c.l.b16 %v1832
        %v1930 = vunpack.c.h.b16 %v1832
        %v1931 = vunpack.c.l.b16 %v1833
        %v1932 = vunpack.c.h.b16 %v1833
        %v1933 = vunpack.c.l.b16 %v1834
        %v1934 = vunpack.c.h.b16 %v1834
        %v1935 = vunpack.c.l.b16 %v1835
        %v1936 = vunpack.c.h.b16 %v1835
        %v1937 = vunpack.c.l.b16 %v1836
        %v1938 = vunpack.c.h.b16 %v1836
        %v1939 = vunpack.c.l.b16 %v1837
        %v1940 = vunpack.c.h.b16 %v1837
        %v1941 = vunpack.c.l.b16 %v1838
        %v1942 = vunpack.c.h.b16 %v1838
        %v1943 = vunpack.c.l.b16 %v1839
        %v1944 = vunpack.c.h.b16 %v1839
        %v1945 = vunpack.c.l.b16 %v1840
        %v1946 = vunpack.c.h.b16 %v1840
        %v1947 = vunpack.c.l.b16 %v1841
        %v1948 = vunpack.c.h.b16 %v1841
        %v1949 = vunpack.c.l.b16 %v1842
        %v1950 = vunpack.c.h.b16 %v1842
        %v1951 = vunpack.c.l.b16 %v1843
        %v1952 = vunpack.c.h.b16 %v1843
        %v1953 = vunpack.c.l.b16 %v1844
        %v1954 = vunpack.c.h.b16 %v1844
        %v1955 = vunpack.c.l.b16 %v1845
        %v1956 = vunpack.c.h.b16 %v1845
        %v1957 = vunpack.c.l.b16 %v1846
        %v1958 = vunpack.c.h.b16 %v1846
        %v1959 = vunpack.c.l.b16 %v1847
        %v1960 = vunpack.c.h.b16 %v1847
        %v1961 = vunpack.c.l.b16 %v1848
        %v1962 = vunpack.c.h.b16 %v1848
        %v1963 = vunpack.c.l.b16 %v1849
        %v1964 = vunpack.c.h.b16 %v1849
        %v1965 = vunpack.c.l.b16 %v1850
        %v1966 = vunpack.c.h.b16 %v1850
        %v1967 = vunpack.c.l.b16 %v1851
        %v1968 = vunpack.c.h.b16 %v1851
        %v1969 = vunpack.c.l.b16 %v1852
        %v1970 = vunpack.c.h.b16 %v1852
        %v1971 = vpack.c.b16 %v1911, %v1907
        %v1972 = vpack.c.b16 %v1912, %v1908
        %v1973 = vpack.c.b16 %v1913, %v1909
        %v1974 = vpack.c.b16 %v1914, %v1910
        %v1975 = vpack.c.b16 %v1919, %v1915
        %v1976 = vpack.c.b16 %v1920, %v1916
        %v1977 = vpack.c.b16 %v1921, %v1917
        %v1978 = vpack.c.b16 %v1922, %v1918
        %v1979 = vpack.c.b16 %v1927, %v1923
        %v1980 = vpack.c.b16 %v1928, %v1924
        %v1981 = vpack.c.b16 %v1929, %v1925
        %v1982 = vpack.c.b16 %v1930, %v1926
        %v1983 = vpack.c.b16 %v1935, %v1931
        %v1984 = vpack.c.b16 %v1936, %v1932
        %v1985 = vpack.c.b16 %v1937, %v1933
        %v1986 = vpack.c.b16 %v1938, %v1934
        %v1987 = vpack.c.b16 %v1943, %v1939
        %v1988 = vpack.c.b16 %v1944, %v1940
        %v1989 = vpack.c.b16 %v1945, %v1941
        %v1990 = vpack.c.b16 %v1946, %v1942
        %v1991 = vpack.c.b16 %v1951, %v1947
        %v1992 = vpack.c.b16 %v1952, %v1948
        %v1993 = vpack.c.b16 %v1953, %v1949
        %v1994 = vpack.c.b16 %v1954, %v1950
        %v1995 = vpack.c.b16 %v1959, %v1955
        %v1996 = vpack.c.b16 %v1960, %v1956
        %v1997 = vpack.c.b16 %v1961, %v1957
        %v1998 = vpack.c.b16 %v1962, %v1958
        %v1999 = vpack.c.b16 %v1967, %v1963
        %v2000 = vpack.c.b16 %v1968, %v1964
        %v2001 = vpack.c.b16 %v1969, %v1965
        %v2002 = vpack.c.b16 %v1970, %v1966
        %2035 = vmatprep.subr.bf16.mxu0 %v1972
        %2036 = vmatpush1.bf16.msra.mxu0 %v1971
        %2037 = vmatprep.subr.bf16.mxu0 %v1976
        %2038 = vmatpush1.bf16.msra.mxu0 %v1975
        %2039 = vmatprep.subr.bf16.mxu0 %v1980
        %2040 = vmatpush1.bf16.msra.mxu0 %v1979
        %2041 = vmatprep.subr.bf16.mxu0 %v1984
        %2042 = vmatpush1.bf16.msra.mxu0 %v1983
        %2043 = vmatprep.subr.bf16.mxu0 %v1988
        %2044 = vmatpush1.bf16.msra.mxu0 %v1987
        %2045 = vmatprep.subr.bf16.mxu0 %v1992
        %2046 = vmatpush1.bf16.msra.mxu0 %v1991
        %2047 = vmatprep.subr.bf16.mxu0 %v1996
        %2048 = vmatpush1.bf16.msra.mxu0 %v1995
        %2049 = vmatprep.subr.bf16.mxu0 %v2000
        %2050 = vmatpush1.bf16.msra.mxu0 %v1999
        %2051 = vmatprep.subr.bf16.mxu0 0
        %2052 = vmatpush1.bf16.msra.mxu0 0
        %2053 = vmatprep.subr.bf16.mxu0 0
        %2054 = vmatpush1.bf16.msra.mxu0 0
        %2055 = vmatprep.subr.bf16.mxu0 0
        %2056 = vmatpush1.bf16.msra.mxu0 0
        %2057 = vmatprep.subr.bf16.mxu0 0
        %2058 = vmatpush1.bf16.msra.mxu0 0
        %2059 = vmatprep.subr.bf16.mxu0 0
        %2060 = vmatpush1.bf16.msra.mxu0 0
        %2061 = vmatprep.subr.bf16.mxu0 0
        %2062 = vmatpush1.bf16.msra.mxu0 0
        %2063 = vmatprep.subr.bf16.mxu0 0
        %2064 = vmatpush1.bf16.msra.mxu0 0
        %2065 = vmatprep.subr.bf16.mxu0 0
        %2066 = vmatpush1.bf16.msra.mxu0 0
        %2067 = vmatprep.mubr.bf16.mxu0 0
        %2068 = vmatmul.mubr.bf16.gmra.mrb[0].mxu0 %v1820
        %v2069 = vpop.f32.mrb[0].mxu0
        %v2070 = vadd.f32 %v1858, %v2069
        %v2071 = vpop.f32.mrb[0].mxu0
        %v2072 = vadd.f32 %v1862, %v2071
        %v2073 = vpop.f32.mrb[0].mxu0
        %v2074 = vadd.f32 %v1858, %v2073
        %v2075 = vpop.f32.mrb[0].mxu0
        %v2076 = vadd.f32 %v1862, %v2075
        %2077 = vdwg.mxu0
        %2078 = vmatprep.subr.bf16.mxu0 %v1974
        %2079 = vmatpush1.bf16.msra.mxu0 %v1973
        %2080 = vmatprep.subr.bf16.mxu0 %v1978
        %2081 = vmatpush1.bf16.msra.mxu0 %v1977
        %2082 = vmatprep.subr.bf16.mxu0 %v1982
        %2083 = vmatpush1.bf16.msra.mxu0 %v1981
        %2084 = vmatprep.subr.bf16.mxu0 %v1986
        %2085 = vmatpush1.bf16.msra.mxu0 %v1985
        %2086 = vmatprep.subr.bf16.mxu0 %v1990
        %2087 = vmatpush1.bf16.msra.mxu0 %v1989
        %2088 = vmatprep.subr.bf16.mxu0 %v1994
        %2089 = vmatpush1.bf16.msra.mxu0 %v1993
        %2090 = vmatprep.subr.bf16.mxu0 %v1998
        %2091 = vmatpush1.bf16.msra.mxu0 %v1997
        %2092 = vmatprep.subr.bf16.mxu0 %v2002
        %2093 = vmatpush1.bf16.msra.mxu0 %v2001
        %2094 = vmatprep.subr.bf16.mxu0 0
        %2095 = vmatpush1.bf16.msra.mxu0 0
        %2096 = vmatprep.subr.bf16.mxu0 0
        %2097 = vmatpush1.bf16.msra.mxu0 0
        %2098 = vmatprep.subr.bf16.mxu0 0
        %2099 = vmatpush1.bf16.msra.mxu0 0
        %2100 = vmatprep.subr.bf16.mxu0 0
        %2101 = vmatpush1.bf16.msra.mxu0 0
        %2102 = vmatprep.subr.bf16.mxu0 0
        %2103 = vmatpush1.bf16.msra.mxu0 0
        %2104 = vmatprep.subr.bf16.mxu0 0
        %2105 = vmatpush1.bf16.msra.mxu0 0
        %2106 = vmatprep.subr.bf16.mxu0 0
        %2107 = vmatpush1.bf16.msra.mxu0 0
        %2108 = vmatprep.subr.bf16.mxu0 0
        %2109 = vmatpush1.bf16.msra.mxu0 0
        %2110 = vmatprep.mubr.bf16.mxu0 0
        %2111 = vmatmul.mubr.bf16.gmra.mrb[0].mxu0 %v1820
        %v2112 = vpop.f32.mrb[0].mxu0
        %v2113 = vadd.f32 %v1866, %v2112
        %v2114 = vpop.f32.mrb[0].mxu0
        %v2115 = vadd.f32 %v1870, %v2114
        %v2116 = vpop.f32.mrb[0].mxu0
        %v2117 = vadd.f32 %v1866, %v2116
        %v2118 = vpop.f32.mrb[0].mxu0
        %v2119 = vadd.f32 %v1870, %v2118
        %2120 = vdwg.mxu0
        %v2121 = vmax.f32 %v2070, 0.0
        %v2122 = vmax.f32 %v2072, 0.0
        %v2123 = vmax.f32 %v2113, 0.0
        %v2124 = vmax.f32 %v2115, 0.0
        %v2125 = vmax.f32 %v2074, 0.0
        %v2126 = vmax.f32 %v2076, 0.0
        %v2127 = vmax.f32 %v2117, 0.0
        %v2128 = vmax.f32 %v2119, 0.0
        %v2129 = vpack.c.bf16 %v2125, %v2121
        %v2130 = vpack.c.bf16 %v2126, %v2122
        %v2131 = vpack.c.bf16 %v2127, %v2123
        %v2132 = vpack.c.bf16 %v2128, %v2124
        %v2133 = vld [vmem:[%s678] sm:$0xf]
        %v2134 = vld [vmem:[%s678 + $0x4] sm:$0xf]
        %v2135 = vld [vmem:[%s678 + $0x8] sm:$0xf]
        %v2136 = vld [vmem:[%s678 + $0xc] sm:$0xf]
        %v2137 = vld [vmem:[%s678 + $0x10] sm:$0xf]
        %v2138 = vld [vmem:[%s678 + $0x14] sm:$0xf]
        %v2139 = vld [vmem:[%s678 + $0x18] sm:$0xf]
        %v2140 = vld [vmem:[%s678 + $0x1c] sm:$0xf]
        %v2141 = vld [vmem:[%s678 + $0x20] sm:$0xf]
        %v2142 = vld [vmem:[%s678 + $0x24] sm:$0xf]
        %v2143 = vld [vmem:[%s678 + $0x28] sm:$0xf]
        %v2144 = vld [vmem:[%s678 + $0x2c] sm:$0xf]
        %v2145 = vld [vmem:[%s678 + $0x30] sm:$0xf]
        %v2146 = vld [vmem:[%s678 + $0x34] sm:$0xf]
        %v2147 = vld [vmem:[%s678 + $0x38] sm:$0xf]
        %v2148 = vld [vmem:[%s678 + $0x3c] sm:$0xf]
        %v2149 = vld [vmem:[%s678 + $0x40] sm:$0xf]
        %v2150 = vld [vmem:[%s678 + $0x44] sm:$0xf]
        %v2151 = vld [vmem:[%s678 + $0x48] sm:$0xf]
        %v2152 = vld [vmem:[%s678 + $0x4c] sm:$0xf]
        %v2153 = vld [vmem:[%s678 + $0x50] sm:$0xf]
        %v2154 = vld [vmem:[%s678 + $0x54] sm:$0xf]
        %v2155 = vld [vmem:[%s678 + $0x58] sm:$0xf]
        %v2156 = vld [vmem:[%s678 + $0x5c] sm:$0xf]
        %v2157 = vld [vmem:[%s678 + $0x60] sm:$0xf]
        %v2158 = vld [vmem:[%s678 + $0x64] sm:$0xf]
        %v2159 = vld [vmem:[%s678 + $0x68] sm:$0xf]
        %v2160 = vld [vmem:[%s678 + $0x6c] sm:$0xf]
        %v2161 = vld [vmem:[%s678 + $0x70] sm:$0xf]
        %v2162 = vld [vmem:[%s678 + $0x74] sm:$0xf]
        %v2163 = vld [vmem:[%s678 + $0x78] sm:$0xf]
        %v2164 = vld [vmem:[%s678 + $0x7c] sm:$0xf]
        %v2165 = vld [vmem:[%s678 + $0x80] sm:$0xf]
        %v2166 = vld [vmem:[%s678 + $0x84] sm:$0xf]
        %v2167 = vld [vmem:[%s678 + $0x88] sm:$0xf]
        %v2168 = vld [vmem:[%s678 + $0x8c] sm:$0xf]
        %v2169 = vld [vmem:[%s678 + $0x90] sm:$0xf]
        %v2170 = vld [vmem:[%s678 + $0x94] sm:$0xf]
        %v2171 = vld [vmem:[%s678 + $0x98] sm:$0xf]
        %v2172 = vld [vmem:[%s678 + $0x9c] sm:$0xf]
        %v2173 = vld [vmem:[%s678 + $0xa0] sm:$0xf]
        %v2174 = vld [vmem:[%s678 + $0xa4] sm:$0xf]
        %v2175 = vld [vmem:[%s678 + $0xa8] sm:$0xf]
        %v2176 = vld [vmem:[%s678 + $0xac] sm:$0xf]
        %v2177 = vld [vmem:[%s678 + $0xb0] sm:$0xf]
        %v2178 = vld [vmem:[%s678 + $0xb4] sm:$0xf]
        %v2179 = vld [vmem:[%s678 + $0xb8] sm:$0xf]
        %v2180 = vld [vmem:[%s678 + $0xbc] sm:$0xf]
        %v2181 = vld [vmem:[%s678 + $0xc0] sm:$0xf]
        %v2182 = vld [vmem:[%s678 + $0xc4] sm:$0xf]
        %v2183 = vld [vmem:[%s678 + $0xc8] sm:$0xf]
        %v2184 = vld [vmem:[%s678 + $0xcc] sm:$0xf]
        %v2185 = vld [vmem:[%s678 + $0xd0] sm:$0xf]
        %v2186 = vld [vmem:[%s678 + $0xd4] sm:$0xf]
        %v2187 = vld [vmem:[%s678 + $0xd8] sm:$0xf]
        %v2188 = vld [vmem:[%s678 + $0xdc] sm:$0xf]
        %v2189 = vld [vmem:[%s678 + $0xe0] sm:$0xf]
        %v2190 = vld [vmem:[%s678 + $0xe4] sm:$0xf]
        %v2191 = vld [vmem:[%s678 + $0xe8] sm:$0xf]
        %v2192 = vld [vmem:[%s678 + $0xec] sm:$0xf]
        %v2193 = vld [vmem:[%s678 + $0xf0] sm:$0xf]
        %v2194 = vld [vmem:[%s678 + $0xf4] sm:$0xf]
        %v2195 = vld [vmem:[%s678 + $0xf8] sm:$0xf]
        %v2196 = vld [vmem:[%s678 + $0xfc] sm:$0xf]
        %v2197 = vld [vmem:[%s776] sm:$0x1]
        %v2199 = vlaneseq
        %v2200 = vshrl.u32 %v2199, 7
        %v2201 = vsub.s32 0, %v2200
        %v2202 = vrot.slane %v2197, %v2201
        %v2268 = vunpack.c.l.b16 %v2133
        %v2269 = vunpack.c.l.b16 %v2134
        %v2270 = vunpack.c.l.b16 %v2135
        %v2271 = vunpack.c.l.b16 %v2136
        %v2272 = vunpack.c.l.b16 %v2137
        %v2273 = vunpack.c.l.b16 %v2138
        %v2274 = vunpack.c.l.b16 %v2139
        %v2275 = vunpack.c.l.b16 %v2140
        %v2276 = vunpack.c.l.b16 %v2141
        %v2277 = vunpack.c.l.b16 %v2142
        %v2278 = vunpack.c.l.b16 %v2143
        %v2279 = vunpack.c.l.b16 %v2144
        %v2280 = vunpack.c.l.b16 %v2145
        %v2281 = vunpack.c.l.b16 %v2146
        %v2282 = vunpack.c.l.b16 %v2147
        %v2283 = vunpack.c.l.b16 %v2148
        %v2284 = vunpack.c.l.b16 %v2149
        %v2285 = vunpack.c.l.b16 %v2150
        %v2286 = vunpack.c.l.b16 %v2151
        %v2287 = vunpack.c.l.b16 %v2152
        %v2288 = vunpack.c.l.b16 %v2153
        %v2289 = vunpack.c.l.b16 %v2154
        %v2290 = vunpack.c.l.b16 %v2155
        %v2291 = vunpack.c.l.b16 %v2156
        %v2292 = vunpack.c.l.b16 %v2157
        %v2293 = vunpack.c.l.b16 %v2158
        %v2294 = vunpack.c.l.b16 %v2159
        %v2295 = vunpack.c.l.b16 %v2160
        %v2296 = vunpack.c.l.b16 %v2161
        %v2297 = vunpack.c.l.b16 %v2162
        %v2298 = vunpack.c.l.b16 %v2163
        %v2299 = vunpack.c.l.b16 %v2164
        %v2300 = vunpack.c.l.b16 %v2165
        %v2301 = vunpack.c.l.b16 %v2166
        %v2302 = vunpack.c.l.b16 %v2167
        %v2303 = vunpack.c.l.b16 %v2168
        %v2304 = vunpack.c.l.b16 %v2169
        %v2305 = vunpack.c.l.b16 %v2170
        %v2306 = vunpack.c.l.b16 %v2171
        %v2307 = vunpack.c.l.b16 %v2172
        %v2308 = vunpack.c.l.b16 %v2173
        %v2309 = vunpack.c.l.b16 %v2174
        %v2310 = vunpack.c.l.b16 %v2175
        %v2311 = vunpack.c.l.b16 %v2176
        %v2312 = vunpack.c.l.b16 %v2177
        %v2313 = vunpack.c.l.b16 %v2178
        %v2314 = vunpack.c.l.b16 %v2179
        %v2315 = vunpack.c.l.b16 %v2180
        %v2316 = vunpack.c.l.b16 %v2181
        %v2317 = vunpack.c.l.b16 %v2182
        %v2318 = vunpack.c.l.b16 %v2183
        %v2319 = vunpack.c.l.b16 %v2184
        %v2320 = vunpack.c.l.b16 %v2185
        %v2321 = vunpack.c.l.b16 %v2186
        %v2322 = vunpack.c.l.b16 %v2187
        %v2323 = vunpack.c.l.b16 %v2188
        %v2324 = vunpack.c.l.b16 %v2189
        %v2325 = vunpack.c.l.b16 %v2190
        %v2326 = vunpack.c.l.b16 %v2191
        %v2327 = vunpack.c.l.b16 %v2192
        %v2328 = vunpack.c.l.b16 %v2193
        %v2329 = vunpack.c.l.b16 %v2194
        %v2330 = vunpack.c.l.b16 %v2195
        %v2331 = vunpack.c.l.b16 %v2196
        %v2332 = vpack.c.b16 %v2269, %v2268
        %v2333 = vpack.c.b16 %v2271, %v2270
        %v2334 = vpack.c.b16 %v2273, %v2272
        %v2335 = vpack.c.b16 %v2275, %v2274
        %v2336 = vpack.c.b16 %v2277, %v2276
        %v2337 = vpack.c.b16 %v2279, %v2278
        %v2338 = vpack.c.b16 %v2281, %v2280
        %v2339 = vpack.c.b16 %v2283, %v2282
        %v2340 = vpack.c.b16 %v2285, %v2284
        %v2341 = vpack.c.b16 %v2287, %v2286
        %v2342 = vpack.c.b16 %v2289, %v2288
        %v2343 = vpack.c.b16 %v2291, %v2290
        %v2344 = vpack.c.b16 %v2293, %v2292
        %v2345 = vpack.c.b16 %v2295, %v2294
        %v2346 = vpack.c.b16 %v2297, %v2296
        %v2347 = vpack.c.b16 %v2299, %v2298
        %v2348 = vpack.c.b16 %v2301, %v2300
        %v2349 = vpack.c.b16 %v2303, %v2302
        %v2350 = vpack.c.b16 %v2305, %v2304
        %v2351 = vpack.c.b16 %v2307, %v2306
        %v2352 = vpack.c.b16 %v2309, %v2308
        %v2353 = vpack.c.b16 %v2311, %v2310
        %v2354 = vpack.c.b16 %v2313, %v2312
        %v2355 = vpack.c.b16 %v2315, %v2314
        %v2356 = vpack.c.b16 %v2317, %v2316
        %v2357 = vpack.c.b16 %v2319, %v2318
        %v2358 = vpack.c.b16 %v2321, %v2320
        %v2359 = vpack.c.b16 %v2323, %v2322
        %v2360 = vpack.c.b16 %v2325, %v2324
        %v2361 = vpack.c.b16 %v2327, %v2326
        %v2362 = vpack.c.b16 %v2329, %v2328
        %v2363 = vpack.c.b16 %v2331, %v2330
        %2396 = vmatprep.subr.bf16.mxu0 0
        %2397 = vmatpush1.bf16.msra.mxu0 %v2332
        %2398 = vmatprep.subr.bf16.mxu0 0
        %2399 = vmatpush1.bf16.msra.mxu0 %v2333
        %2400 = vmatprep.subr.bf16.mxu0 0
        %2401 = vmatpush1.bf16.msra.mxu0 %v2334
        %2402 = vmatprep.subr.bf16.mxu0 0
        %2403 = vmatpush1.bf16.msra.mxu0 %v2335
        %2404 = vmatprep.subr.bf16.mxu0 0
        %2405 = vmatpush1.bf16.msra.mxu0 %v2336
        %2406 = vmatprep.subr.bf16.mxu0 0
        %2407 = vmatpush1.bf16.msra.mxu0 %v2337
        %2408 = vmatprep.subr.bf16.mxu0 0
        %2409 = vmatpush1.bf16.msra.mxu0 %v2338
        %2410 = vmatprep.subr.bf16.mxu0 0
        %2411 = vmatpush1.bf16.msra.mxu0 %v2339
        %2412 = vmatprep.subr.bf16.mxu0 0
        %2413 = vmatpush1.bf16.msra.mxu0 %v2340
        %2414 = vmatprep.subr.bf16.mxu0 0
        %2415 = vmatpush1.bf16.msra.mxu0 %v2341
        %2416 = vmatprep.subr.bf16.mxu0 0
        %2417 = vmatpush1.bf16.msra.mxu0 %v2342
        %2418 = vmatprep.subr.bf16.mxu0 0
        %2419 = vmatpush1.bf16.msra.mxu0 %v2343
        %2420 = vmatprep.subr.bf16.mxu0 0
        %2421 = vmatpush1.bf16.msra.mxu0 %v2344
        %2422 = vmatprep.subr.bf16.mxu0 0
        %2423 = vmatpush1.bf16.msra.mxu0 %v2345
        %2424 = vmatprep.subr.bf16.mxu0 0
        %2425 = vmatpush1.bf16.msra.mxu0 %v2346
        %2426 = vmatprep.subr.bf16.mxu0 0
        %2427 = vmatpush1.bf16.msra.mxu0 %v2347
        %2428 = vmatprep.mubr.bf16.mxu0 %v2130
        %2429 = vmatmul.mubr.bf16.gmra.mrb[0].mxu0 %v2129
        %v2430 = vpop.f32.mrb[0].mxu0
        %v2431 = vadd.f32 %v2202, %v2430
        %v2432 = vpop.f32.mrb[0].mxu0
        %v2433 = vpop.f32.mrb[0].mxu0
        %v2434 = vadd.f32 %v2202, %v2433
        %v2435 = vpop.f32.mrb[0].mxu0
        %2436 = vdwg.mxu0
        %2437 = vmatprep.subr.bf16.mxu0 0
        %2438 = vmatpush1.bf16.msra.mxu0 %v2348
        %2439 = vmatprep.subr.bf16.mxu0 0
        %2440 = vmatpush1.bf16.msra.mxu0 %v2349
        %2441 = vmatprep.subr.bf16.mxu0 0
        %2442 = vmatpush1.bf16.msra.mxu0 %v2350
        %2443 = vmatprep.subr.bf16.mxu0 0
        %2444 = vmatpush1.bf16.msra.mxu0 %v2351
        %2445 = vmatprep.subr.bf16.mxu0 0
        %2446 = vmatpush1.bf16.msra.mxu0 %v2352
        %2447 = vmatprep.subr.bf16.mxu0 0
        %2448 = vmatpush1.bf16.msra.mxu0 %v2353
        %2449 = vmatprep.subr.bf16.mxu0 0
        %2450 = vmatpush1.bf16.msra.mxu0 %v2354
        %2451 = vmatprep.subr.bf16.mxu0 0
        %2452 = vmatpush1.bf16.msra.mxu0 %v2355
        %2453 = vmatprep.subr.bf16.mxu0 0
        %2454 = vmatpush1.bf16.msra.mxu0 %v2356
        %2455 = vmatprep.subr.bf16.mxu0 0
        %2456 = vmatpush1.bf16.msra.mxu0 %v2357
        %2457 = vmatprep.subr.bf16.mxu0 0
        %2458 = vmatpush1.bf16.msra.mxu0 %v2358
        %2459 = vmatprep.subr.bf16.mxu0 0
        %2460 = vmatpush1.bf16.msra.mxu0 %v2359
        %2461 = vmatprep.subr.bf16.mxu0 0
        %2462 = vmatpush1.bf16.msra.mxu0 %v2360
        %2463 = vmatprep.subr.bf16.mxu0 0
        %2464 = vmatpush1.bf16.msra.mxu0 %v2361
        %2465 = vmatprep.subr.bf16.mxu0 0
        %2466 = vmatpush1.bf16.msra.mxu0 %v2362
        %2467 = vmatprep.subr.bf16.mxu0 0
        %2468 = vmatpush1.bf16.msra.mxu0 %v2363
        %2469 = vmatprep.mubr.bf16.mxu0 %v2132
        %2470 = vmatmul.mubr.bf16.gmra.mrb[0].mxu0 %v2131
        %v2471 = vpop.f32.mrb[0].mxu0
        %v2472 = vadd.f32 %v2431, %v2471
        %v2473 = vpop.f32.mrb[0].mxu0
        %v2474 = vpop.f32.mrb[0].mxu0
        %v2475 = vadd.f32 %v2434, %v2474
        %v2476 = vpop.f32.mrb[0].mxu0
        %2477 = vdwg.mxu0
        %v2478 = vadd.f32 %v1818, %v2472
        %v2479 = vadd.f32 %v1819, %v2475
        %v2480 = vld [vmem:[%s785] sm:$0x1]
        %v2481 = vld [vmem:[%s788] sm:$0x1]
        %2482 = vadd.xlane.f32.xlu0 %v2478
        %v2483 = vpop.xlane.xlu0 %2482
        %2484 = vadd.xlane.f32.xlu0 %v2479
        %v2485 = vpop.xlane.xlu0 %2484
        %v2486 = vmul.f32 %v2483, %v1785
        %v2487 = vmul.f32 %v2485, %v1785
        %v2488 = vsub.f32 %v2478, %v2486
        %v2489 = vsub.f32 %v2479, %v2487
        %v2490 = vmul.f32 %v2488, %v2488
        %v2491 = vmul.f32 %v2489, %v2489
        %2492 = vadd.xlane.f32.xlu0 %v2490
        %v2493 = vpop.xlane.xlu0 %2492
        %2494 = vadd.xlane.f32.xlu0 %v2491
        %v2495 = vpop.xlane.xlu0 %2494
        %v2496 = vmul.f32 %v2493, %v1785
        %v2497 = vmul.f32 %v2495, %v1785
        %v2498 = vadd.f32 %v2496, 1e-05
        %v2499 = vadd.f32 %v2497, 1e-05
        %v2500 = vrsqrt.pop %v2498
        %v2501 = vrsqrt.pop %v2499
        %v2502 = vmul.f32 %v2488, %v2500
        %v2503 = vmul.f32 %v2489, %v2501
        %v2505 = vlaneseq
        %v2506 = vshrl.u32 %v2505, 7
        %v2507 = vsub.s32 0, %v2506
        %v2508 = vrot.slane %v2480, %v2507
        %v2510 = vmul.f32 %v2502, %v2508
        %v2511 = vmul.f32 %v2503, %v2508
        %v2513 = vlaneseq
        %v2514 = vshrl.u32 %v2513, 7
        %v2515 = vsub.s32 0, %v2514
        %v2516 = vrot.slane %v2481, %v2515
        %v2518 = vadd.f32 %v2510, %v2516
        %v2519 = vadd.f32 %v2511, %v2516
        %2520 = vst [vmem:[#allocation6] sm:$0xff] %v2518
        %2521 = vst [vmem:[#allocation6 + $0x8] sm:$0xff] %v2519
        %2522 = vst [vmem:[%s769] sm:$0xff] %v2518
        %2523 = vst [vmem:[%s769 + $0x8] sm:$0xff] %v2519
        %s2524 = sand.u32 %s397, 1
        %s2525 = scalar_lea.sflag [#allocation9], %s2524
        %s2526 = sand.u32 %s397, 1
        %s2527 = smul.addr %s2526, 16
        %s2528 = scalar_lea.vmem [#allocation19], %s2527
        // Predicated region
        $region105: #{tpu_custom_call.1} parent=71 // pred_check
          %p2529 = pneg %p407
        $region106: #{tpu_custom_call.1} parent=71 // pred_check_branch
          %2531 = sbr.rel (%p2529) target = $region108
        $region107: #{tpu_custom_call.1} parent=71 // pred_region
          %s2533 = ssub.s32 256, 256
          %2534 = vsyncadd %s2525, %s2533
          %s2535 = smul.addr %s43, 2
          %s2536 = smul.addr %s2535, 128
          %s2537 = scalar_lea.hbm %s13, %s2536
          %s2538 = sshll.u32 %s2528, 4
          %s2539 = int_to_ptr.vmem [resolvable:$true] %s2538
          %2544 = dma.vmem_to_hbm [thread:$0]  %s2539, 256, %s2537, %s2525, 128, 128, 8
        $region108: #{tpu_custom_call.1} parent=71 // pred_fallthru
          _
      $region72: #{tpu_custom_call.1} parent=5 // pred_fallthru
        _
      %p2545 = scmp.le.s32.totalorder 2, %s34
      // Predicated region
      $region109: #{tpu_custom_call.1} parent=5 // pred_check
        %p2546 = pneg %p2545
      $region110: #{tpu_custom_call.1} parent=5 // pred_check_branch
        %2548 = sbr.rel (%p2546) target = $region112
      $region111: #{tpu_custom_call.1} parent=5 // pred_region
        %s2549 = ssub.s32 %s34, 2
        // Predicated region
        $region113: #{tpu_custom_call.1} parent=111 // pred_check
          %p2550 = pneg %p413
        $region114: #{tpu_custom_call.1} parent=111 // pred_check_branch
          %2552 = sbr.rel (%p2550) target = $region116
        $region115: #{tpu_custom_call.1} parent=111 // pred_region
          %s2553 = sand.u32 %s398, 1
          %s2554 = scalar_lea.sflag [#allocation9], %s2553
          %s2555 = sand.u32 %s398, 1
          %s2556 = smul.addr %s2555, 16
          %s2557 = scalar_lea.vmem [#allocation19], %s2556
          %2558 = dma.done %s2554, 256
        $region116: #{tpu_custom_call.1} parent=111 // pred_fallthru
          _
      $region112: #{tpu_custom_call.1} parent=5 // pred_fallthru
        _
    $region6: #{tpu_custom_call.1} parent=1 // loop_footer
      %s38 = sadd.s32 1, %s34
    $region7: #{tpu_custom_call.1} parent=1 // loop_footer_branch
      %33 = sbr.rel target = $region3
    $region8: #{tpu_custom_call.1} parent=1 // loop_exit
      _
    %2559 = vsyncpa [#allocation8], 1
    %s2560 = scalar_lea.sflag [#allocation8], 1
    %2561 = vsyncpa %s2560, 1
    %2562 = vsyncpa [#allocation11], 1
    %s2563 = scalar_lea.sflag [#allocation11], 1
    %2564 = vsyncpa %s2563, 1
    %2565 = vsyncpa [#allocation14], 1
    %s2566 = scalar_lea.sflag [#allocation14], 1
    %2567 = vsyncpa %s2566, 1
    %2568 = vsyncpa [#allocation17], 1
    %s2569 = scalar_lea.sflag [#allocation17], 1
    %2570 = vsyncpa %s2569, 1
    %2571 = vsyncpa [#allocation9], 1
    %s2572 = scalar_lea.sflag [#allocation9], 1
    %2573 = vsyncpa %s2572, 1

</llo_original>
